<compile_context>
chip_gen: v7x
topology: tpu7x:2x2x1
jax: 0.10.0
libtpu: 0.0.40
codegen_flags: <defaults>
</compile_context>

<pallas_src>
import jax
import jax.numpy as jnp
import numpy as np
from jax.experimental import pallas as pl
from jax.experimental.pallas import tpu as pltpu


# ------------------------------ fused kernel --------------------------------

def _make_fused_kernel(num_rnn_layers, n_trunk_layers, seq, batch):
    def kernel(*refs):
        u_ref, y_ref = refs[0], refs[1]                      # (seq*batch, in), (seq*batch, trunk_in)
        k = 2
        rnn_refs = [(refs[k + 3 * l], refs[k + 3 * l + 1], refs[k + 3 * l + 2])
                    for l in range(num_rnn_layers)]
        k += 3 * num_rnn_layers
        wfc_ref, bfc_ref = refs[k], refs[k + 1]
        k += 2
        trunk_refs = [(refs[k + 2 * l], refs[k + 2 * l + 1]) for l in range(n_trunk_layers)]
        k += 2 * n_trunk_layers
        out_ref = refs[k]

        # ---- hoist every weight/bias load once (no per-timestep vld/broadcast) ----
        rnn_w = [(wih[...], whh[...], b[...]) for (wih, whh, b) in rnn_refs]
        w_fc, b_fc = wfc_ref[...], bfc_ref[...]
        trunk_w = [(w[...], b[...]) for (w, b) in trunk_refs]

        # ---------------------------- branch RNN stack -----------------------------
        x = u_ref[...]                                       # (seq*batch, in0)
        for (w_ih, w_hh, b) in rnn_w:
            hid = w_hh.shape[1]
            # input-to-hidden projection for ALL timesteps in one MXU op,
            # bias (b_ih + b_hh) folded in here, off the serial path.
            xp = jnp.dot(x, w_ih, preferred_element_type=jnp.float32) + b   # (seq*batch, hid)

            # serial recurrence: only h @ W_hh^T per step remains on the chain.
            # seq=8 is a compile-time constant -> static unroll keeps LLO visibility.
            h = jnp.zeros((batch, hid), jnp.float32)
            outs = []
            for t in range(seq):
                h = jnp.tanh(
                    jnp.dot(h, w_hh, preferred_element_type=jnp.float32)
                    + xp[t * batch:(t + 1) * batch, :])
                outs.append(h)
            x = jnp.concatenate(outs, axis=0)                # (seq*batch, hid) -> next layer

        # ----------------- branch FC, once over all timesteps ----------------------
        g = jnp.dot(x, w_fc, preferred_element_type=jnp.float32) + b_fc     # (seq*batch, p)

        # ----------------- trunk MLP, once over all timesteps ----------------------
        f = y_ref[...]                                       # (seq*batch, trunk_in)
        for (w, b) in trunk_w:
            f = jnp.tanh(jnp.dot(f, w, preferred_element_type=jnp.float32) + b)

        # -------- single cross-lane reduction + single output store ---------------
        out_ref[...] = jnp.sum(g * f, axis=-1, keepdims=True)               # (seq*batch, 1)
    return kernel


# ------------------------------ param packing -------------------------------

def pack_params(params):
    """One-time weight repacking so the forward path does zero transposes.

    W_ih and W_hh are kept SEPARATE (not concatenated) so the input projection can
    be hoisted out of the time loop; the two biases are pre-summed.
    """
    rnn = []
    for lp in params["rnn"]:
        rnn.append((jnp.transpose(lp["w_ih"]),               # (in_l, hid)
                    jnp.transpose(lp["w_hh"]),               # (hid, hid)
                    (lp["b_ih"] + lp["b_hh"]).reshape(1, -1)))  # (1, hid)
    fc = (jnp.transpose(params["fc"]["w"]),                  # (hid, p)
          params["fc"]["b"].reshape(1, -1))                  # (1, p)
    trunk = [(jnp.transpose(w), b.reshape(1, -1)) for (w, b) in params["trunk"]]
    return {"rnn": rnn, "fc": fc, "trunk": trunk}


# ------------------------------- forward pass --------------------------------

def deeponet_rnn_forward(u, y, packed):
    """u: (seq, batch, branch_in); y: (seq, batch, trunk_in) -> G: (seq, batch)."""
    seq, batch, _ = u.shape
    num_rnn = len(packed["rnn"])
    n_trunk = len(packed["trunk"])

    # All layout massaging stays outside the kernel (cheap XLA ops under jit).
    u_flat = u.reshape(seq * batch, -1)
    y_flat = y.reshape(seq * batch, -1)

    args = [u_flat, y_flat]
    for w_ih, w_hh, b in packed["rnn"]:
        args += [w_ih, w_hh, b]
    args += list(packed["fc"])
    for w, b in packed["trunk"]:
        args += [w, b]

    out = pl.pallas_call(
        _make_fused_kernel(num_rnn, n_trunk, seq, batch),
        out_shape=jax.ShapeDtypeStruct((seq * batch, 1), jnp.float32),
        in_specs=[pl.BlockSpec(memory_space=pltpu.VMEM)] * len(args),
        out_specs=pl.BlockSpec(memory_space=pltpu.VMEM),
    )(*args)
    return out.reshape(seq, batch)


deeponet_rnn_forward_jit = jax.jit(deeponet_rnn_forward)


# -------------------------- deterministic params -----------------------------

def init_params(key, branch_in, hidden, num_layers, trunk_sizes):
    keys = iter(jax.random.split(key, 4 * num_layers + 2 + 2 * (len(trunk_sizes) - 1)))

    def unif(k, shape, bound):
        return jax.random.uniform(k, shape, jnp.float32, -bound, bound)

    rnn = []
    for l in range(num_layers):
        in_dim = branch_in if l == 0 else hidden
        bnd = 1.0 / np.sqrt(hidden)
        rnn.append({
            "w_ih": unif(next(keys), (hidden, in_dim), bnd),
            "w_hh": unif(next(keys), (hidden, hidden), bnd),
            "b_ih": unif(next(keys), (hidden,), bnd),
            "b_hh": unif(next(keys), (hidden,), bnd),
        })

    p = trunk_sizes[-1]
    bnd = 1.0 / np.sqrt(hidden)
    fc = {"w": unif(next(keys), (p, hidden), bnd),
          "b": unif(next(keys), (p,), bnd)}

    trunk = []
    for i in range(len(trunk_sizes) - 1):
        fan_in, fan_out = trunk_sizes[i], trunk_sizes[i + 1]
        bnd = 1.0 / np.sqrt(fan_in)
        trunk.append((unif(next(keys), (fan_out, fan_in), bnd),
                      unif(next(keys), (fan_out,), bnd)))

    return {"rnn": rnn, "fc": fc, "trunk": trunk}


# ----------------------------- pure-JAX reference ----------------------------

def reference_forward(u, y, params):
    x = u
    for lp in params["rnn"]:
        seq, batch, _ = x.shape
        hidden = lp["w_hh"].shape[0]
        h = jnp.zeros((batch, hidden), jnp.float32)
        outs = []
        for t in range(seq):
            h = jnp.tanh(x[t] @ lp["w_ih"].T + lp["b_ih"]
                         + h @ lp["w_hh"].T + lp["b_hh"])
            outs.append(h)
        x = jnp.stack(outs, axis=0)
    g = x @ params["fc"]["w"].T + params["fc"]["b"]
    f = y
    for (w, b) in params["trunk"]:
        f = jnp.tanh(f @ w.T + b)
    return jnp.sum(g * f, axis=-1)


# ----------------------------------- main ------------------------------------

if __name__ == "__main__":
    seq_len = 8
    batch = 2
    branch_in_size = 4
    branch_hidden_size = 32
    branch_num_layers = 2
    trunk_size_ary = [3, 32, 16]     # trunk input dim 3, output dim p = 16

    key = jax.random.PRNGKey(0)
    k_u, k_y, k_p = jax.random.split(key, 3)

    u = jax.random.normal(k_u, (seq_len, batch, branch_in_size), jnp.float32)
    y = jax.random.normal(k_y, (seq_len, batch, trunk_size_ary[0]), jnp.float32)
    params = init_params(k_p, branch_in_size, branch_hidden_size,
                         branch_num_layers, trunk_size_ary)

    packed = pack_params(params)     # one-time weight repack (no per-call transposes)

    G = deeponet_rnn_forward_jit(u, y, packed)
    G = jax.block_until_ready(G)

    G_ref = reference_forward(u, y, params)
    np.testing.assert_allclose(np.asarray(G), np.asarray(G_ref),
                               rtol=1e-5, atol=1e-5)
    assert G.shape == (seq_len, batch)

    print("KERNEL_OK")
</pallas_src>

<mosaic_0001>
module attributes {stable_mosaic.version = 11 : i64} {
  func.func @kernel(%arg0: memref<16x4xf32, #tpu.memory_space<vmem>>, %arg1: memref<16x3xf32, #tpu.memory_space<vmem>>, %arg2: memref<4x32xf32, #tpu.memory_space<vmem>>, %arg3: memref<32x32xf32, #tpu.memory_space<vmem>>, %arg4: memref<1x32xf32, #tpu.memory_space<vmem>>, %arg5: memref<32x32xf32, #tpu.memory_space<vmem>>, %arg6: memref<32x32xf32, #tpu.memory_space<vmem>>, %arg7: memref<1x32xf32, #tpu.memory_space<vmem>>, %arg8: memref<32x16xf32, #tpu.memory_space<vmem>>, %arg9: memref<1x16xf32, #tpu.memory_space<vmem>>, %arg10: memref<3x32xf32, #tpu.memory_space<vmem>>, %arg11: memref<1x32xf32, #tpu.memory_space<vmem>>, %arg12: memref<32x16xf32, #tpu.memory_space<vmem>>, %arg13: memref<1x16xf32, #tpu.memory_space<vmem>>, %arg14: memref<16x1xf32, #tpu.memory_space<vmem>>) attributes {dimension_semantics = [], scalar_prefetch = 0 : i64, scratch_operands = 0 : i64, tpu.core_type = #tpu.core_type<tc>} {
    %c0 = arith.constant 0 : index
    %c0_0 = arith.constant 0 : index
    %0 = vector.load %arg2[%c0, %c0_0] : memref<4x32xf32, #tpu.memory_space<vmem>>, vector<4x32xf32>
    %c0_1 = arith.constant 0 : index
    %c0_2 = arith.constant 0 : index
    %1 = vector.load %arg3[%c0_1, %c0_2] : memref<32x32xf32, #tpu.memory_space<vmem>>, vector<32x32xf32>
    %c0_3 = arith.constant 0 : index
    %c0_4 = arith.constant 0 : index
    %2 = vector.load %arg4[%c0_3, %c0_4] : memref<1x32xf32, #tpu.memory_space<vmem>>, vector<1x32xf32>
    %c0_5 = arith.constant 0 : index
    %c0_6 = arith.constant 0 : index
    %3 = vector.load %arg5[%c0_5, %c0_6] : memref<32x32xf32, #tpu.memory_space<vmem>>, vector<32x32xf32>
    %c0_7 = arith.constant 0 : index
    %c0_8 = arith.constant 0 : index
    %4 = vector.load %arg6[%c0_7, %c0_8] : memref<32x32xf32, #tpu.memory_space<vmem>>, vector<32x32xf32>
    %c0_9 = arith.constant 0 : index
    %c0_10 = arith.constant 0 : index
    %5 = vector.load %arg7[%c0_9, %c0_10] : memref<1x32xf32, #tpu.memory_space<vmem>>, vector<1x32xf32>
    %c0_11 = arith.constant 0 : index
    %c0_12 = arith.constant 0 : index
    %6 = vector.load %arg8[%c0_11, %c0_12] : memref<32x16xf32, #tpu.memory_space<vmem>>, vector<32x16xf32>
    %c0_13 = arith.constant 0 : index
    %c0_14 = arith.constant 0 : index
    %7 = vector.load %arg9[%c0_13, %c0_14] : memref<1x16xf32, #tpu.memory_space<vmem>>, vector<1x16xf32>
    %c0_15 = arith.constant 0 : index
    %c0_16 = arith.constant 0 : index
    %8 = vector.load %arg10[%c0_15, %c0_16] : memref<3x32xf32, #tpu.memory_space<vmem>>, vector<3x32xf32>
    %c0_17 = arith.constant 0 : index
    %c0_18 = arith.constant 0 : index
    %9 = vector.load %arg11[%c0_17, %c0_18] : memref<1x32xf32, #tpu.memory_space<vmem>>, vector<1x32xf32>
    %c0_19 = arith.constant 0 : index
    %c0_20 = arith.constant 0 : index
    %10 = vector.load %arg12[%c0_19, %c0_20] : memref<32x16xf32, #tpu.memory_space<vmem>>, vector<32x16xf32>
    %c0_21 = arith.constant 0 : index
    %c0_22 = arith.constant 0 : index
    %11 = vector.load %arg13[%c0_21, %c0_22] : memref<1x16xf32, #tpu.memory_space<vmem>>, vector<1x16xf32>
    %c0_23 = arith.constant 0 : index
    %c0_24 = arith.constant 0 : index
    %12 = vector.load %arg0[%c0_23, %c0_24] : memref<16x4xf32, #tpu.memory_space<vmem>>, vector<16x4xf32>
    %cst = arith.constant dense<0.000000e+00> : vector<16x32xf32>
    %13 = tpu.matmul %12, %0, %cst {dimension_numbers = #tpu.dot_dimension_numbers<[1], [0], [0], [1], [0, 0, 1, 1], [], []>} : vector<16x4xf32>, vector<4x32xf32>, vector<16x32xf32> -> vector<16x32xf32>
    %14 = vector.broadcast %2 : vector<1x32xf32> to vector<16x32xf32>
    %15 = arith.addf %13, %14 : vector<16x32xf32>
    %cst_25 = arith.constant 0.000000e+00 : f32
    %16 = vector.broadcast %cst_25 : f32 to vector<2x32xf32>
    %cst_26 = arith.constant dense<0.000000e+00> : vector<2x32xf32>
    %17 = tpu.matmul %16, %1, %cst_26 {dimension_numbers = #tpu.dot_dimension_numbers<[1], [0], [0], [1], [0, 0, 1, 1], [], []>} : vector<2x32xf32>, vector<32x32xf32>, vector<2x32xf32> -> vector<2x32xf32>
    %18 = vector.extract_strided_slice %15 {offsets = [0, 0], sizes = [2, 32], strides = [1, 1]} : vector<16x32xf32> to vector<2x32xf32>
    %19 = arith.addf %17, %18 : vector<2x32xf32>
    %20 = math.tanh %19 : vector<2x32xf32>
    %cst_27 = arith.constant dense<0.000000e+00> : vector<2x32xf32>
    %21 = tpu.matmul %20, %1, %cst_27 {dimension_numbers = #tpu.dot_dimension_numbers<[1], [0], [0], [1], [0, 0, 1, 1], [], []>} : vector<2x32xf32>, vector<32x32xf32>, vector<2x32xf32> -> vector<2x32xf32>
    %22 = vector.extract_strided_slice %15 {offsets = [2, 0], sizes = [2, 32], strides = [1, 1]} : vector<16x32xf32> to vector<2x32xf32>
    %23 = arith.addf %21, %22 : vector<2x32xf32>
    %24 = math.tanh %23 : vector<2x32xf32>
    %cst_28 = arith.constant dense<0.000000e+00> : vector<2x32xf32>
    %25 = tpu.matmul %24, %1, %cst_28 {dimension_numbers = #tpu.dot_dimension_numbers<[1], [0], [0], [1], [0, 0, 1, 1], [], []>} : vector<2x32xf32>, vector<32x32xf32>, vector<2x32xf32> -> vector<2x32xf32>
    %26 = vector.extract_strided_slice %15 {offsets = [4, 0], sizes = [2, 32], strides = [1, 1]} : vector<16x32xf32> to vector<2x32xf32>
    %27 = arith.addf %25, %26 : vector<2x32xf32>
    %28 = math.tanh %27 : vector<2x32xf32>
    %cst_29 = arith.constant dense<0.000000e+00> : vector<2x32xf32>
    %29 = tpu.matmul %28, %1, %cst_29 {dimension_numbers = #tpu.dot_dimension_numbers<[1], [0], [0], [1], [0, 0, 1, 1], [], []>} : vector<2x32xf32>, vector<32x32xf32>, vector<2x32xf32> -> vector<2x32xf32>
    %30 = vector.extract_strided_slice %15 {offsets = [6, 0], sizes = [2, 32], strides = [1, 1]} : vector<16x32xf32> to vector<2x32xf32>
    %31 = arith.addf %29, %30 : vector<2x32xf32>
    %32 = math.tanh %31 : vector<2x32xf32>
    %cst_30 = arith.constant dense<0.000000e+00> : vector<2x32xf32>
    %33 = tpu.matmul %32, %1, %cst_30 {dimension_numbers = #tpu.dot_dimension_numbers<[1], [0], [0], [1], [0, 0, 1, 1], [], []>} : vector<2x32xf32>, vector<32x32xf32>, vector<2x32xf32> -> vector<2x32xf32>
    %34 = vector.extract_strided_slice %15 {offsets = [8, 0], sizes = [2, 32], strides = [1, 1]} : vector<16x32xf32> to vector<2x32xf32>
    %35 = arith.addf %33, %34 : vector<2x32xf32>
    %36 = math.tanh %35 : vector<2x32xf32>
    %cst_31 = arith.constant dense<0.000000e+00> : vector<2x32xf32>
    %37 = tpu.matmul %36, %1, %cst_31 {dimension_numbers = #tpu.dot_dimension_numbers<[1], [0], [0], [1], [0, 0, 1, 1], [], []>} : vector<2x32xf32>, vector<32x32xf32>, vector<2x32xf32> -> vector<2x32xf32>
    %38 = vector.extract_strided_slice %15 {offsets = [10, 0], sizes = [2, 32], strides = [1, 1]} : vector<16x32xf32> to vector<2x32xf32>
    %39 = arith.addf %37, %38 : vector<2x32xf32>
    %40 = math.tanh %39 : vector<2x32xf32>
    %cst_32 = arith.constant dense<0.000000e+00> : vector<2x32xf32>
    %41 = tpu.matmul %40, %1, %cst_32 {dimension_numbers = #tpu.dot_dimension_numbers<[1], [0], [0], [1], [0, 0, 1, 1], [], []>} : vector<2x32xf32>, vector<32x32xf32>, vector<2x32xf32> -> vector<2x32xf32>
    %42 = vector.extract_strided_slice %15 {offsets = [12, 0], sizes = [2, 32], strides = [1, 1]} : vector<16x32xf32> to vector<2x32xf32>
    %43 = arith.addf %41, %42 : vector<2x32xf32>
    %44 = math.tanh %43 : vector<2x32xf32>
    %cst_33 = arith.constant dense<0.000000e+00> : vector<2x32xf32>
    %45 = tpu.matmul %44, %1, %cst_33 {dimension_numbers = #tpu.dot_dimension_numbers<[1], [0], [0], [1], [0, 0, 1, 1], [], []>} : vector<2x32xf32>, vector<32x32xf32>, vector<2x32xf32> -> vector<2x32xf32>
    %46 = vector.extract_strided_slice %15 {offsets = [14, 0], sizes = [2, 32], strides = [1, 1]} : vector<16x32xf32> to vector<2x32xf32>
    %47 = arith.addf %45, %46 : vector<2x32xf32>
    %48 = math.tanh %47 : vector<2x32xf32>
    %49 = tpu.concatenate %20, %24, %28, %32, %36, %40, %44, %48 in 0 : vector<2x32xf32>, vector<2x32xf32>, vector<2x32xf32>, vector<2x32xf32>, vector<2x32xf32>, vector<2x32xf32>, vector<2x32xf32>, vector<2x32xf32> -> vector<16x32xf32>
    %cst_34 = arith.constant dense<0.000000e+00> : vector<16x32xf32>
    %50 = tpu.matmul %49, %3, %cst_34 {dimension_numbers = #tpu.dot_dimension_numbers<[1], [0], [0], [1], [0, 0, 1, 1], [], []>} : vector<16x32xf32>, vector<32x32xf32>, vector<16x32xf32> -> vector<16x32xf32>
    %51 = vector.broadcast %5 : vector<1x32xf32> to vector<16x32xf32>
    %52 = arith.addf %50, %51 : vector<16x32xf32>
    %cst_35 = arith.constant 0.000000e+00 : f32
    %53 = vector.broadcast %cst_35 : f32 to vector<2x32xf32>
    %cst_36 = arith.constant dense<0.000000e+00> : vector<2x32xf32>
    %54 = tpu.matmul %53, %4, %cst_36 {dimension_numbers = #tpu.dot_dimension_numbers<[1], [0], [0], [1], [0, 0, 1, 1], [], []>} : vector<2x32xf32>, vector<32x32xf32>, vector<2x32xf32> -> vector<2x32xf32>
    %55 = vector.extract_strided_slice %52 {offsets = [0, 0], sizes = [2, 32], strides = [1, 1]} : vector<16x32xf32> to vector<2x32xf32>
    %56 = arith.addf %54, %55 : vector<2x32xf32>
    %57 = math.tanh %56 : vector<2x32xf32>
    %cst_37 = arith.constant dense<0.000000e+00> : vector<2x32xf32>
    %58 = tpu.matmul %57, %4, %cst_37 {dimension_numbers = #tpu.dot_dimension_numbers<[1], [0], [0], [1], [0, 0, 1, 1], [], []>} : vector<2x32xf32>, vector<32x32xf32>, vector<2x32xf32> -> vector<2x32xf32>
    %59 = vector.extract_strided_slice %52 {offsets = [2, 0], sizes = [2, 32], strides = [1, 1]} : vector<16x32xf32> to vector<2x32xf32>
    %60 = arith.addf %58, %59 : vector<2x32xf32>
    %61 = math.tanh %60 : vector<2x32xf32>
    %cst_38 = arith.constant dense<0.000000e+00> : vector<2x32xf32>
    %62 = tpu.matmul %61, %4, %cst_38 {dimension_numbers = #tpu.dot_dimension_numbers<[1], [0], [0], [1], [0, 0, 1, 1], [], []>} : vector<2x32xf32>, vector<32x32xf32>, vector<2x32xf32> -> vector<2x32xf32>
    %63 = vector.extract_strided_slice %52 {offsets = [4, 0], sizes = [2, 32], strides = [1, 1]} : vector<16x32xf32> to vector<2x32xf32>
    %64 = arith.addf %62, %63 : vector<2x32xf32>
    %65 = math.tanh %64 : vector<2x32xf32>
    %cst_39 = arith.constant dense<0.000000e+00> : vector<2x32xf32>
    %66 = tpu.matmul %65, %4, %cst_39 {dimension_numbers = #tpu.dot_dimension_numbers<[1], [0], [0], [1], [0, 0, 1, 1], [], []>} : vector<2x32xf32>, vector<32x32xf32>, vector<2x32xf32> -> vector<2x32xf32>
    %67 = vector.extract_strided_slice %52 {offsets = [6, 0], sizes = [2, 32], strides = [1, 1]} : vector<16x32xf32> to vector<2x32xf32>
    %68 = arith.addf %66, %67 : vector<2x32xf32>
    %69 = math.tanh %68 : vector<2x32xf32>
    %cst_40 = arith.constant dense<0.000000e+00> : vector<2x32xf32>
    %70 = tpu.matmul %69, %4, %cst_40 {dimension_numbers = #tpu.dot_dimension_numbers<[1], [0], [0], [1], [0, 0, 1, 1], [], []>} : vector<2x32xf32>, vector<32x32xf32>, vector<2x32xf32> -> vector<2x32xf32>
    %71 = vector.extract_strided_slice %52 {offsets = [8, 0], sizes = [2, 32], strides = [1, 1]} : vector<16x32xf32> to vector<2x32xf32>
    %72 = arith.addf %70, %71 : vector<2x32xf32>
    %73 = math.tanh %72 : vector<2x32xf32>
    %cst_41 = arith.constant dense<0.000000e+00> : vector<2x32xf32>
    %74 = tpu.matmul %73, %4, %cst_41 {dimension_numbers = #tpu.dot_dimension_numbers<[1], [0], [0], [1], [0, 0, 1, 1], [], []>} : vector<2x32xf32>, vector<32x32xf32>, vector<2x32xf32> -> vector<2x32xf32>
    %75 = vector.extract_strided_slice %52 {offsets = [10, 0], sizes = [2, 32], strides = [1, 1]} : vector<16x32xf32> to vector<2x32xf32>
    %76 = arith.addf %74, %75 : vector<2x32xf32>
    %77 = math.tanh %76 : vector<2x32xf32>
    %cst_42 = arith.constant dense<0.000000e+00> : vector<2x32xf32>
    %78 = tpu.matmul %77, %4, %cst_42 {dimension_numbers = #tpu.dot_dimension_numbers<[1], [0], [0], [1], [0, 0, 1, 1], [], []>} : vector<2x32xf32>, vector<32x32xf32>, vector<2x32xf32> -> vector<2x32xf32>
    %79 = vector.extract_strided_slice %52 {offsets = [12, 0], sizes = [2, 32], strides = [1, 1]} : vector<16x32xf32> to vector<2x32xf32>
    %80 = arith.addf %78, %79 : vector<2x32xf32>
    %81 = math.tanh %80 : vector<2x32xf32>
    %cst_43 = arith.constant dense<0.000000e+00> : vector<2x32xf32>
    %82 = tpu.matmul %81, %4, %cst_43 {dimension_numbers = #tpu.dot_dimension_numbers<[1], [0], [0], [1], [0, 0, 1, 1], [], []>} : vector<2x32xf32>, vector<32x32xf32>, vector<2x32xf32> -> vector<2x32xf32>
    %83 = vector.extract_strided_slice %52 {offsets = [14, 0], sizes = [2, 32], strides = [1, 1]} : vector<16x32xf32> to vector<2x32xf32>
    %84 = arith.addf %82, %83 : vector<2x32xf32>
    %85 = math.tanh %84 : vector<2x32xf32>
    %86 = tpu.concatenate %57, %61, %65, %69, %73, %77, %81, %85 in 0 : vector<2x32xf32>, vector<2x32xf32>, vector<2x32xf32>, vector<2x32xf32>, vector<2x32xf32>, vector<2x32xf32>, vector<2x32xf32>, vector<2x32xf32> -> vector<16x32xf32>
    %cst_44 = arith.constant dense<0.000000e+00> : vector<16x16xf32>
    %87 = tpu.matmul %86, %6, %cst_44 {dimension_numbers = #tpu.dot_dimension_numbers<[1], [0], [0], [1], [0, 0, 1, 1], [], []>} : vector<16x32xf32>, vector<32x16xf32>, vector<16x16xf32> -> vector<16x16xf32>
    %88 = vector.broadcast %7 : vector<1x16xf32> to vector<16x16xf32>
    %89 = arith.addf %87, %88 : vector<16x16xf32>
    %c0_45 = arith.constant 0 : index
    %c0_46 = arith.constant 0 : index
    %90 = vector.load %arg1[%c0_45, %c0_46] : memref<16x3xf32, #tpu.memory_space<vmem>>, vector<16x3xf32>
    %cst_47 = arith.constant dense<0.000000e+00> : vector<16x32xf32>
    %91 = tpu.matmul %90, %8, %cst_47 {dimension_numbers = #tpu.dot_dimension_numbers<[1], [0], [0], [1], [0, 0, 1, 1], [], []>} : vector<16x3xf32>, vector<3x32xf32>, vector<16x32xf32> -> vector<16x32xf32>
    %92 = vector.broadcast %9 : vector<1x32xf32> to vector<16x32xf32>
    %93 = arith.addf %91, %92 : vector<16x32xf32>
    %94 = math.tanh %93 : vector<16x32xf32>
    %cst_48 = arith.constant dense<0.000000e+00> : vector<16x16xf32>
    %95 = tpu.matmul %94, %10, %cst_48 {dimension_numbers = #tpu.dot_dimension_numbers<[1], [0], [0], [1], [0, 0, 1, 1], [], []>} : vector<16x32xf32>, vector<32x16xf32>, vector<16x16xf32> -> vector<16x16xf32>
    %96 = vector.broadcast %11 : vector<1x16xf32> to vector<16x16xf32>
    %97 = arith.addf %95, %96 : vector<16x16xf32>
    %98 = math.tanh %97 : vector<16x16xf32>
    %99 = arith.mulf %89, %98 : vector<16x16xf32>
    %cst_49 = arith.constant dense<0.000000e+00> : vector<16xf32>
    %100 = vector.multi_reduction <add>, %99, %cst_49 [1] : vector<16x16xf32> to vector<16xf32>
    %101 = vector.shape_cast %100 : vector<16xf32> to vector<16x1xf32>
    %c0_50 = arith.constant 0 : index
    %c0_51 = arith.constant 0 : index
    %102 = vector.load %arg14[%c0_50, %c0_51] : memref<16x1xf32, #tpu.memory_space<vmem>>, vector<16x1xf32>
    tpu.vector_store %arg14[%c0_50, %c0_51], %101 {strides = array<i32>} : memref<16x1xf32, #tpu.memory_space<vmem>>, vector<16x1xf32>,
    return
  }
}

</mosaic_0001>

<llo_original>
// kernel: deeponet_rnn_forward.1
$region0: #{deeponet_rnn_forward.1}
  #allocation0 [shape = 'u32[]', space=smem, size = 0x4, offset = 0x4, fixed_abs, tag = 'smem constant byte address 0x4 - core index']
  #allocation1 [shape = 'u32[144,128]{1,0:T(1,128)}', space=vmem, size = 0x12000, scoped, tag = 'internal scratch']
  %s0 = inlined_call_operand.vmem [shape: f32[16,4], index: 0, kind: input, shape index: {}]
  %s1 = inlined_call_operand.vmem [shape: f32[16,3], index: 1, kind: input, shape index: {}]
  %s2 = inlined_call_operand.vmem [shape: f32[4,32], index: 2, kind: input, shape index: {}]
  %s3 = inlined_call_operand.vmem [shape: f32[32,32], index: 3, kind: input, shape index: {}]
  %s4 = inlined_call_operand.vmem [shape: f32[1,32], index: 4, kind: input, shape index: {}]
  %s5 = inlined_call_operand.vmem [shape: f32[32,32], index: 5, kind: input, shape index: {}]
  %s6 = inlined_call_operand.vmem [shape: f32[32,32], index: 6, kind: input, shape index: {}]
  %s7 = inlined_call_operand.vmem [shape: f32[1,32], index: 7, kind: input, shape index: {}]
  %s8 = inlined_call_operand.vmem [shape: f32[32,16], index: 8, kind: input, shape index: {}]
  %s9 = inlined_call_operand.vmem [shape: f32[1,16], index: 9, kind: input, shape index: {}]
  %s10 = inlined_call_operand.vmem [shape: f32[3,32], index: 10, kind: input, shape index: {}]
  %s11 = inlined_call_operand.vmem [shape: f32[1,32], index: 11, kind: input, shape index: {}]
  %s12 = inlined_call_operand.vmem [shape: f32[32,16], index: 12, kind: input, shape index: {}]
  %s13 = inlined_call_operand.vmem [shape: f32[1,16], index: 13, kind: input, shape index: {}]
  %s14 = inlined_call_operand.vmem [shape: f32[16,1], index: 14, kind: output, shape index: {}]
  %s15 = sld [smem:[#allocation0]]
  $region66: #{deeponet_rnn_forward.1} parent=0
    _
  %s17 = ssub.s32 1, %s15
  %s18 = scalar_select 0, %s17, %s15
  // Predicated region
  $region2: #{deeponet_rnn_forward.1} parent=0 // pred_check
    _
  $region3: #{deeponet_rnn_forward.1} parent=0 // pred_check_branch
    %20 = sbr.rel (0) target = $region5
  $region4: #{deeponet_rnn_forward.1} parent=0 // pred_region
    _
  $region5: #{deeponet_rnn_forward.1} parent=0 // pred_fallthru
    _
  // Predicated region
  $region6: #{deeponet_rnn_forward.1} parent=0 // pred_check
    _
  $region7: #{deeponet_rnn_forward.1} parent=0 // pred_check_branch
    %22 = sbr.rel (0) target = $region9
  $region8: #{deeponet_rnn_forward.1} parent=0 // pred_region
    _
  $region9: #{deeponet_rnn_forward.1} parent=0 // pred_fallthru
    _
  // Predicated region
  $region10: #{deeponet_rnn_forward.1} parent=0 // pred_check
    _
  $region11: #{deeponet_rnn_forward.1} parent=0 // pred_check_branch
    %24 = sbr.rel (0) target = $region13
  $region12: #{deeponet_rnn_forward.1} parent=0 // pred_region
    _
  $region13: #{deeponet_rnn_forward.1} parent=0 // pred_fallthru
    _
  // Predicated region
  $region14: #{deeponet_rnn_forward.1} parent=0 // pred_check
    _
  $region15: #{deeponet_rnn_forward.1} parent=0 // pred_check_branch
    %26 = sbr.rel (0) target = $region17
  $region16: #{deeponet_rnn_forward.1} parent=0 // pred_region
    _
  $region17: #{deeponet_rnn_forward.1} parent=0 // pred_fallthru
    _
  // Predicated region
  $region18: #{deeponet_rnn_forward.1} parent=0 // pred_check
    _
  $region19: #{deeponet_rnn_forward.1} parent=0 // pred_check_branch
    %28 = sbr.rel (0) target = $region21
  $region20: #{deeponet_rnn_forward.1} parent=0 // pred_region
    _
  $region21: #{deeponet_rnn_forward.1} parent=0 // pred_fallthru
    _
  // Predicated region
  $region22: #{deeponet_rnn_forward.1} parent=0 // pred_check
    _
  $region23: #{deeponet_rnn_forward.1} parent=0 // pred_check_branch
    %30 = sbr.rel (0) target = $region25
  $region24: #{deeponet_rnn_forward.1} parent=0 // pred_region
    _
  $region25: #{deeponet_rnn_forward.1} parent=0 // pred_fallthru
    _
  // Predicated region
  $region26: #{deeponet_rnn_forward.1} parent=0 // pred_check
    _
  $region27: #{deeponet_rnn_forward.1} parent=0 // pred_check_branch
    %32 = sbr.rel (0) target = $region29
  $region28: #{deeponet_rnn_forward.1} parent=0 // pred_region
    _
  $region29: #{deeponet_rnn_forward.1} parent=0 // pred_fallthru
    _
  // Predicated region
  $region30: #{deeponet_rnn_forward.1} parent=0 // pred_check
    _
  $region31: #{deeponet_rnn_forward.1} parent=0 // pred_check_branch
    %34 = sbr.rel (0) target = $region33
  $region32: #{deeponet_rnn_forward.1} parent=0 // pred_region
    _
  $region33: #{deeponet_rnn_forward.1} parent=0 // pred_fallthru
    _
  // Predicated region
  $region34: #{deeponet_rnn_forward.1} parent=0 // pred_check
    _
  $region35: #{deeponet_rnn_forward.1} parent=0 // pred_check_branch
    %36 = sbr.rel (0) target = $region37
  $region36: #{deeponet_rnn_forward.1} parent=0 // pred_region
    _
  $region37: #{deeponet_rnn_forward.1} parent=0 // pred_fallthru
    _
  // Predicated region
  $region38: #{deeponet_rnn_forward.1} parent=0 // pred_check
    _
  $region39: #{deeponet_rnn_forward.1} parent=0 // pred_check_branch
    %38 = sbr.rel (0) target = $region41
  $region40: #{deeponet_rnn_forward.1} parent=0 // pred_region
    _
  $region41: #{deeponet_rnn_forward.1} parent=0 // pred_fallthru
    _
  // Predicated region
  $region42: #{deeponet_rnn_forward.1} parent=0 // pred_check
    _
  $region43: #{deeponet_rnn_forward.1} parent=0 // pred_check_branch
    %40 = sbr.rel (0) target = $region45
  $region44: #{deeponet_rnn_forward.1} parent=0 // pred_region
    _
  $region45: #{deeponet_rnn_forward.1} parent=0 // pred_fallthru
    _
  // Predicated region
  $region46: #{deeponet_rnn_forward.1} parent=0 // pred_check
    _
  $region47: #{deeponet_rnn_forward.1} parent=0 // pred_check_branch
    %42 = sbr.rel (0) target = $region49
  $region48: #{deeponet_rnn_forward.1} parent=0 // pred_region
    _
  $region49: #{deeponet_rnn_forward.1} parent=0 // pred_fallthru
    _
  // Predicated region
  $region50: #{deeponet_rnn_forward.1} parent=0 // pred_check
    _
  $region51: #{deeponet_rnn_forward.1} parent=0 // pred_check_branch
    %44 = sbr.rel (0) target = $region53
  $region52: #{deeponet_rnn_forward.1} parent=0 // pred_region
    _
  $region53: #{deeponet_rnn_forward.1} parent=0 // pred_fallthru
    _
  // Predicated region
  $region54: #{deeponet_rnn_forward.1} parent=0 // pred_check
    _
  $region55: #{deeponet_rnn_forward.1} parent=0 // pred_check_branch
    %46 = sbr.rel (0) target = $region57
  $region56: #{deeponet_rnn_forward.1} parent=0 // pred_region
    _
  $region57: #{deeponet_rnn_forward.1} parent=0 // pred_fallthru
    _
  %v47 = vld [vmem:[%s2] sm:$0xf]
  %v48 = vld [vmem:[%s3] sm:$0xff]
  %v49 = vld [vmem:[%s3 + $0x8] sm:$0xff]
  %v50 = vld [vmem:[%s3 + $0x10] sm:$0xff]
  %v51 = vld [vmem:[%s3 + $0x18] sm:$0xff]
  %v52 = vld [vmem:[%s4] sm:$0x1]
  %v53 = vld [vmem:[%s5] sm:$0xff]
  %v54 = vld [vmem:[%s5 + $0x8] sm:$0xff]
  %v55 = vld [vmem:[%s5 + $0x10] sm:$0xff]
  %v56 = vld [vmem:[%s5 + $0x18] sm:$0xff]
  %v57 = vld [vmem:[%s6] sm:$0xff]
  %v58 = vld [vmem:[%s6 + $0x8] sm:$0xff]
  %v59 = vld [vmem:[%s6 + $0x10] sm:$0xff]
  %v60 = vld [vmem:[%s6 + $0x18] sm:$0xff]
  %v61 = vld [vmem:[%s7] sm:$0x1]
  %v62 = vld [vmem:[%s8] sm:$0xff]
  %v63 = vld [vmem:[%s8 + $0x8] sm:$0xff]
  %v64 = vld [vmem:[%s8 + $0x10] sm:$0xff]
  %v65 = vld [vmem:[%s8 + $0x18] sm:$0xff]
  %v66 = vld [vmem:[%s9] sm:$0x1]
  %v67 = vld [vmem:[%s10] sm:$0x7]
  %v68 = vld [vmem:[%s11] sm:$0x1]
  %v69 = vld [vmem:[%s12] sm:$0xff]
  %v70 = vld [vmem:[%s12 + $0x8] sm:$0xff]
  %v71 = vld [vmem:[%s12 + $0x10] sm:$0xff]
  %v72 = vld [vmem:[%s12 + $0x18] sm:$0xff]
  %v73 = vld [vmem:[%s13] sm:$0x1]
  %v74 = vld [vmem:[%s0] sm:$0xff]
  %v75 = vld [vmem:[%s0 + $0x8] sm:$0xff]
  %v77 = vlaneseq
  %v78 = vshrl.u32 %v77, 7
  %v79 = vsub.s32 0, %v78
  %v80 = vrot.slane %v52, %v79
  %vm82 = vcmask 31744
  %v84 = vsel %vm82, %v74, 0
  %v87 = vsel %vm82, %v75, 0
  %vm89 = vcmask 1043456
  %v91 = vsel %vm89, %v47, 0
  %93 = vmatprep.subr.mxu0 0.0
  %94 = vmatpush1.msra.mxu0 %v91
  %95 = vmatprep.subr.mxu0 0.0
  %96 = vmatpush1.msra.mxu0 0.0
  %97 = vmatprep.subr.mxu0 0.0
  %98 = vmatpush1.msra.mxu0 0.0
  %99 = vmatprep.subr.mxu0 0.0
  %100 = vmatpush1.msra.mxu0 0.0
  %101 = vmatprep.subr.mxu0 0.0
  %102 = vmatpush1.msra.mxu0 0.0
  %103 = vmatprep.subr.mxu0 0.0
  %104 = vmatpush1.msra.mxu0 0.0
  %105 = vmatprep.subr.mxu0 0.0
  %106 = vmatpush1.msra.mxu0 0.0
  %107 = vmatprep.subr.mxu0 0.0
  %108 = vmatpush1.msra.mxu0 0.0
  %109 = vmatprep.subr.mxu0 0.0
  %110 = vmatpush1.msra.mxu0 0.0
  %111 = vmatprep.subr.mxu0 0.0
  %112 = vmatpush1.msra.mxu0 0.0
  %113 = vmatprep.subr.mxu0 0.0
  %114 = vmatpush1.msra.mxu0 0.0
  %115 = vmatprep.subr.mxu0 0.0
  %116 = vmatpush1.msra.mxu0 0.0
  %117 = vmatprep.subr.mxu0 0.0
  %118 = vmatpush1.msra.mxu0 0.0
  %119 = vmatprep.subr.mxu0 0.0
  %120 = vmatpush1.msra.mxu0 0.0
  %121 = vmatprep.subr.mxu0 0.0
  %122 = vmatpush1.msra.mxu0 0.0
  %123 = vmatprep.subr.mxu0 0.0
  %124 = vmatpush1.msra.mxu0 0.0
  %125 = vmatprep.subr.mxu0 0.0
  %126 = vmatpush1.msra.mxu0 0.0
  %127 = vmatprep.subr.mxu0 0.0
  %128 = vmatpush1.msra.mxu0 0.0
  %129 = vmatprep.subr.mxu0 0.0
  %130 = vmatpush1.msra.mxu0 0.0
  %131 = vmatprep.subr.mxu0 0.0
  %132 = vmatpush1.msra.mxu0 0.0
  %133 = vmatprep.subr.mxu0 0.0
  %134 = vmatpush1.msra.mxu0 0.0
  %135 = vmatprep.subr.mxu0 0.0
  %136 = vmatpush1.msra.mxu0 0.0
  %137 = vmatprep.subr.mxu0 0.0
  %138 = vmatpush1.msra.mxu0 0.0
  %139 = vmatprep.subr.mxu0 0.0
  %140 = vmatpush1.msra.mxu0 0.0
  %141 = vmatprep.subr.mxu0 0.0
  %142 = vmatpush1.msra.mxu0 0.0
  %143 = vmatprep.subr.mxu0 0.0
  %144 = vmatpush1.msra.mxu0 0.0
  %145 = vmatprep.subr.mxu0 0.0
  %146 = vmatpush1.msra.mxu0 0.0
  %147 = vmatprep.subr.mxu0 0.0
  %148 = vmatpush1.msra.mxu0 0.0
  %149 = vmatprep.subr.mxu0 0.0
  %150 = vmatpush1.msra.mxu0 0.0
  %151 = vmatprep.subr.mxu0 0.0
  %152 = vmatpush1.msra.mxu0 0.0
  %153 = vmatprep.subr.mxu0 0.0
  %154 = vmatpush1.msra.mxu0 0.0
  %155 = vmatprep.subr.mxu0 0.0
  %156 = vmatpush1.msra.mxu0 0.0
  %157 = vmatprep.mubr.f32.mxu0 0.0
  %158 = vmatmul.mubr.f32.gmra.mrb[0].mxu0 %v84
  %v159 = vpop.f32.mrb[0].mxu0
  %v160 = vadd.f32 %v80, %v159
  %v161 = vpop.f32.mrb[0].mxu0
  %162 = vmatprep.mubr.f32.mxu0 0.0
  %163 = vmatmul.mubr.f32.gmra.mrb[0].mxu0 %v87
  %v164 = vpop.f32.mrb[0].mxu0
  %v165 = vadd.f32 %v80, %v164
  %v166 = vpop.f32.mrb[0].mxu0
  %167 = vdwg.mxu0
  %vm168 = vcmask 261120
  %v170 = vsel %vm168, 0.0, 0
  %172 = vmatprep.subr.mxu0 0.0
  %173 = vmatpush1.msra.mxu0 %v48
  %174 = vmatprep.subr.mxu0 0.0
  %175 = vmatpush1.msra.mxu0 %v49
  %176 = vmatprep.subr.mxu0 0.0
  %177 = vmatpush1.msra.mxu0 %v50
  %178 = vmatprep.subr.mxu0 0.0
  %179 = vmatpush1.msra.mxu0 %v51
  %180 = vmatprep.subr.mxu0 0.0
  %181 = vmatpush1.msra.mxu0 0.0
  %182 = vmatprep.subr.mxu0 0.0
  %183 = vmatpush1.msra.mxu0 0.0
  %184 = vmatprep.subr.mxu0 0.0
  %185 = vmatpush1.msra.mxu0 0.0
  %186 = vmatprep.subr.mxu0 0.0
  %187 = vmatpush1.msra.mxu0 0.0
  %188 = vmatprep.subr.mxu0 0.0
  %189 = vmatpush1.msra.mxu0 0.0
  %190 = vmatprep.subr.mxu0 0.0
  %191 = vmatpush1.msra.mxu0 0.0
  %192 = vmatprep.subr.mxu0 0.0
  %193 = vmatpush1.msra.mxu0 0.0
  %194 = vmatprep.subr.mxu0 0.0
  %195 = vmatpush1.msra.mxu0 0.0
  %196 = vmatprep.subr.mxu0 0.0
  %197 = vmatpush1.msra.mxu0 0.0
  %198 = vmatprep.subr.mxu0 0.0
  %199 = vmatpush1.msra.mxu0 0.0
  %200 = vmatprep.subr.mxu0 0.0
  %201 = vmatpush1.msra.mxu0 0.0
  %202 = vmatprep.subr.mxu0 0.0
  %203 = vmatpush1.msra.mxu0 0.0
  %204 = vmatprep.subr.mxu0 0.0
  %205 = vmatpush1.msra.mxu0 0.0
  %206 = vmatprep.subr.mxu0 0.0
  %207 = vmatpush1.msra.mxu0 0.0
  %208 = vmatprep.subr.mxu0 0.0
  %209 = vmatpush1.msra.mxu0 0.0
  %210 = vmatprep.subr.mxu0 0.0
  %211 = vmatpush1.msra.mxu0 0.0
  %212 = vmatprep.subr.mxu0 0.0
  %213 = vmatpush1.msra.mxu0 0.0
  %214 = vmatprep.subr.mxu0 0.0
  %215 = vmatpush1.msra.mxu0 0.0
  %216 = vmatprep.subr.mxu0 0.0
  %217 = vmatpush1.msra.mxu0 0.0
  %218 = vmatprep.subr.mxu0 0.0
  %219 = vmatpush1.msra.mxu0 0.0
  %220 = vmatprep.subr.mxu0 0.0
  %221 = vmatpush1.msra.mxu0 0.0
  %222 = vmatprep.subr.mxu0 0.0
  %223 = vmatpush1.msra.mxu0 0.0
  %224 = vmatprep.subr.mxu0 0.0
  %225 = vmatpush1.msra.mxu0 0.0
  %226 = vmatprep.subr.mxu0 0.0
  %227 = vmatpush1.msra.mxu0 0.0
  %228 = vmatprep.subr.mxu0 0.0
  %229 = vmatpush1.msra.mxu0 0.0
  %230 = vmatprep.subr.mxu0 0.0
  %231 = vmatpush1.msra.mxu0 0.0
  %232 = vmatprep.subr.mxu0 0.0
  %233 = vmatpush1.msra.mxu0 0.0
  %234 = vmatprep.subr.mxu0 0.0
  %235 = vmatpush1.msra.mxu0 0.0
  %236 = vmatprep.mubr.f32.mxu0 0.0
  %237 = vmatmul.mubr.f32.gmra.mrb[0].mxu0 %v170
  %v238 = vpop.f32.mrb[0].mxu0
  %v239 = vadd.f32 %v160, %v238
  %v240 = vpop.f32.mrb[0].mxu0
  %241 = vdwg.mxu0
  %v242 = vtanh.pop %v239
  %v244 = vrot.slane %v160, 2
  %v247 = vsel %vm168, %v242, 0
  %249 = vmatprep.subr.mxu0 0.0
  %250 = vmatpush1.msra.mxu0 %v48
  %251 = vmatprep.subr.mxu0 0.0
  %252 = vmatpush1.msra.mxu0 %v49
  %253 = vmatprep.subr.mxu0 0.0
  %254 = vmatpush1.msra.mxu0 %v50
  %255 = vmatprep.subr.mxu0 0.0
  %256 = vmatpush1.msra.mxu0 %v51
  %257 = vmatprep.subr.mxu0 0.0
  %258 = vmatpush1.msra.mxu0 0.0
  %259 = vmatprep.subr.mxu0 0.0
  %260 = vmatpush1.msra.mxu0 0.0
  %261 = vmatprep.subr.mxu0 0.0
  %262 = vmatpush1.msra.mxu0 0.0
  %263 = vmatprep.subr.mxu0 0.0
  %264 = vmatpush1.msra.mxu0 0.0
  %265 = vmatprep.subr.mxu0 0.0
  %266 = vmatpush1.msra.mxu0 0.0
  %267 = vmatprep.subr.mxu0 0.0
  %268 = vmatpush1.msra.mxu0 0.0
  %269 = vmatprep.subr.mxu0 0.0
  %270 = vmatpush1.msra.mxu0 0.0
  %271 = vmatprep.subr.mxu0 0.0
  %272 = vmatpush1.msra.mxu0 0.0
  %273 = vmatprep.subr.mxu0 0.0
  %274 = vmatpush1.msra.mxu0 0.0
  %275 = vmatprep.subr.mxu0 0.0
  %276 = vmatpush1.msra.mxu0 0.0
  %277 = vmatprep.subr.mxu0 0.0
  %278 = vmatpush1.msra.mxu0 0.0
  %279 = vmatprep.subr.mxu0 0.0
  %280 = vmatpush1.msra.mxu0 0.0
  %281 = vmatprep.subr.mxu0 0.0
  %282 = vmatpush1.msra.mxu0 0.0
  %283 = vmatprep.subr.mxu0 0.0
  %284 = vmatpush1.msra.mxu0 0.0
  %285 = vmatprep.subr.mxu0 0.0
  %286 = vmatpush1.msra.mxu0 0.0
  %287 = vmatprep.subr.mxu0 0.0
  %288 = vmatpush1.msra.mxu0 0.0
  %289 = vmatprep.subr.mxu0 0.0
  %290 = vmatpush1.msra.mxu0 0.0
  %291 = vmatprep.subr.mxu0 0.0
  %292 = vmatpush1.msra.mxu0 0.0
  %293 = vmatprep.subr.mxu0 0.0
  %294 = vmatpush1.msra.mxu0 0.0
  %295 = vmatprep.subr.mxu0 0.0
  %296 = vmatpush1.msra.mxu0 0.0
  %297 = vmatprep.subr.mxu0 0.0
  %298 = vmatpush1.msra.mxu0 0.0
  %299 = vmatprep.subr.mxu0 0.0
  %300 = vmatpush1.msra.mxu0 0.0
  %301 = vmatprep.subr.mxu0 0.0
  %302 = vmatpush1.msra.mxu0 0.0
  %303 = vmatprep.subr.mxu0 0.0
  %304 = vmatpush1.msra.mxu0 0.0
  %305 = vmatprep.subr.mxu0 0.0
  %306 = vmatpush1.msra.mxu0 0.0
  %307 = vmatprep.subr.mxu0 0.0
  %308 = vmatpush1.msra.mxu0 0.0
  %309 = vmatprep.subr.mxu0 0.0
  %310 = vmatpush1.msra.mxu0 0.0
  %311 = vmatprep.subr.mxu0 0.0
  %312 = vmatpush1.msra.mxu0 0.0
  %313 = vmatprep.mubr.f32.mxu0 0.0
  %314 = vmatmul.mubr.f32.gmra.mrb[0].mxu0 %v247
  %v315 = vpop.f32.mrb[0].mxu0
  %v316 = vadd.f32 %v244, %v315
  %v317 = vpop.f32.mrb[0].mxu0
  %318 = vdwg.mxu0
  %v319 = vtanh.pop %v316
  %v320 = vrot.slane %v160, 4
  %v323 = vsel %vm168, %v319, 0
  %325 = vmatprep.subr.mxu0 0.0
  %326 = vmatpush1.msra.mxu0 %v48
  %327 = vmatprep.subr.mxu0 0.0
  %328 = vmatpush1.msra.mxu0 %v49
  %329 = vmatprep.subr.mxu0 0.0
  %330 = vmatpush1.msra.mxu0 %v50
  %331 = vmatprep.subr.mxu0 0.0
  %332 = vmatpush1.msra.mxu0 %v51
  %333 = vmatprep.subr.mxu0 0.0
  %334 = vmatpush1.msra.mxu0 0.0
  %335 = vmatprep.subr.mxu0 0.0
  %336 = vmatpush1.msra.mxu0 0.0
  %337 = vmatprep.subr.mxu0 0.0
  %338 = vmatpush1.msra.mxu0 0.0
  %339 = vmatprep.subr.mxu0 0.0
  %340 = vmatpush1.msra.mxu0 0.0
  %341 = vmatprep.subr.mxu0 0.0
  %342 = vmatpush1.msra.mxu0 0.0
  %343 = vmatprep.subr.mxu0 0.0
  %344 = vmatpush1.msra.mxu0 0.0
  %345 = vmatprep.subr.mxu0 0.0
  %346 = vmatpush1.msra.mxu0 0.0
  %347 = vmatprep.subr.mxu0 0.0
  %348 = vmatpush1.msra.mxu0 0.0
  %349 = vmatprep.subr.mxu0 0.0
  %350 = vmatpush1.msra.mxu0 0.0
  %351 = vmatprep.subr.mxu0 0.0
  %352 = vmatpush1.msra.mxu0 0.0
  %353 = vmatprep.subr.mxu0 0.0
  %354 = vmatpush1.msra.mxu0 0.0
  %355 = vmatprep.subr.mxu0 0.0
  %356 = vmatpush1.msra.mxu0 0.0
  %357 = vmatprep.subr.mxu0 0.0
  %358 = vmatpush1.msra.mxu0 0.0
  %359 = vmatprep.subr.mxu0 0.0
  %360 = vmatpush1.msra.mxu0 0.0
  %361 = vmatprep.subr.mxu0 0.0
  %362 = vmatpush1.msra.mxu0 0.0
  %363 = vmatprep.subr.mxu0 0.0
  %364 = vmatpush1.msra.mxu0 0.0
  %365 = vmatprep.subr.mxu0 0.0
  %366 = vmatpush1.msra.mxu0 0.0
  %367 = vmatprep.subr.mxu0 0.0
  %368 = vmatpush1.msra.mxu0 0.0
  %369 = vmatprep.subr.mxu0 0.0
  %370 = vmatpush1.msra.mxu0 0.0
  %371 = vmatprep.subr.mxu0 0.0
  %372 = vmatpush1.msra.mxu0 0.0
  %373 = vmatprep.subr.mxu0 0.0
  %374 = vmatpush1.msra.mxu0 0.0
  %375 = vmatprep.subr.mxu0 0.0
  %376 = vmatpush1.msra.mxu0 0.0
  %377 = vmatprep.subr.mxu0 0.0
  %378 = vmatpush1.msra.mxu0 0.0
  %379 = vmatprep.subr.mxu0 0.0
  %380 = vmatpush1.msra.mxu0 0.0
  %381 = vmatprep.subr.mxu0 0.0
  %382 = vmatpush1.msra.mxu0 0.0
  %383 = vmatprep.subr.mxu0 0.0
  %384 = vmatpush1.msra.mxu0 0.0
  %385 = vmatprep.subr.mxu0 0.0
  %386 = vmatpush1.msra.mxu0 0.0
  %387 = vmatprep.subr.mxu0 0.0
  %388 = vmatpush1.msra.mxu0 0.0
  %389 = vmatprep.mubr.f32.mxu0 0.0
  %390 = vmatmul.mubr.f32.gmra.mrb[0].mxu0 %v323
  %v391 = vpop.f32.mrb[0].mxu0
  %v392 = vadd.f32 %v320, %v391
  %v393 = vpop.f32.mrb[0].mxu0
  %394 = vdwg.mxu0
  %v395 = vtanh.pop %v392
  %v396 = vrot.slane %v160, 6
  %v399 = vsel %vm168, %v395, 0
  %401 = vmatprep.subr.mxu0 0.0
  %402 = vmatpush1.msra.mxu0 %v48
  %403 = vmatprep.subr.mxu0 0.0
  %404 = vmatpush1.msra.mxu0 %v49
  %405 = vmatprep.subr.mxu0 0.0
  %406 = vmatpush1.msra.mxu0 %v50
  %407 = vmatprep.subr.mxu0 0.0
  %408 = vmatpush1.msra.mxu0 %v51
  %409 = vmatprep.subr.mxu0 0.0
  %410 = vmatpush1.msra.mxu0 0.0
  %411 = vmatprep.subr.mxu0 0.0
  %412 = vmatpush1.msra.mxu0 0.0
  %413 = vmatprep.subr.mxu0 0.0
  %414 = vmatpush1.msra.mxu0 0.0
  %415 = vmatprep.subr.mxu0 0.0
  %416 = vmatpush1.msra.mxu0 0.0
  %417 = vmatprep.subr.mxu0 0.0
  %418 = vmatpush1.msra.mxu0 0.0
  %419 = vmatprep.subr.mxu0 0.0
  %420 = vmatpush1.msra.mxu0 0.0
  %421 = vmatprep.subr.mxu0 0.0
  %422 = vmatpush1.msra.mxu0 0.0
  %423 = vmatprep.subr.mxu0 0.0
  %424 = vmatpush1.msra.mxu0 0.0
  %425 = vmatprep.subr.mxu0 0.0
  %426 = vmatpush1.msra.mxu0 0.0
  %427 = vmatprep.subr.mxu0 0.0
  %428 = vmatpush1.msra.mxu0 0.0
  %429 = vmatprep.subr.mxu0 0.0
  %430 = vmatpush1.msra.mxu0 0.0
  %431 = vmatprep.subr.mxu0 0.0
  %432 = vmatpush1.msra.mxu0 0.0
  %433 = vmatprep.subr.mxu0 0.0
  %434 = vmatpush1.msra.mxu0 0.0
  %435 = vmatprep.subr.mxu0 0.0
  %436 = vmatpush1.msra.mxu0 0.0
  %437 = vmatprep.subr.mxu0 0.0
  %438 = vmatpush1.msra.mxu0 0.0
  %439 = vmatprep.subr.mxu0 0.0
  %440 = vmatpush1.msra.mxu0 0.0
  %441 = vmatprep.subr.mxu0 0.0
  %442 = vmatpush1.msra.mxu0 0.0
  %443 = vmatprep.subr.mxu0 0.0
  %444 = vmatpush1.msra.mxu0 0.0
  %445 = vmatprep.subr.mxu0 0.0
  %446 = vmatpush1.msra.mxu0 0.0
  %447 = vmatprep.subr.mxu0 0.0
  %448 = vmatpush1.msra.mxu0 0.0
  %449 = vmatprep.subr.mxu0 0.0
  %450 = vmatpush1.msra.mxu0 0.0
  %451 = vmatprep.subr.mxu0 0.0
  %452 = vmatpush1.msra.mxu0 0.0
  %453 = vmatprep.subr.mxu0 0.0
  %454 = vmatpush1.msra.mxu0 0.0
  %455 = vmatprep.subr.mxu0 0.0
  %456 = vmatpush1.msra.mxu0 0.0
  %457 = vmatprep.subr.mxu0 0.0
  %458 = vmatpush1.msra.mxu0 0.0
  %459 = vmatprep.subr.mxu0 0.0
  %460 = vmatpush1.msra.mxu0 0.0
  %461 = vmatprep.subr.mxu0 0.0
  %462 = vmatpush1.msra.mxu0 0.0
  %463 = vmatprep.subr.mxu0 0.0
  %464 = vmatpush1.msra.mxu0 0.0
  %465 = vmatprep.mubr.f32.mxu0 0.0
  %466 = vmatmul.mubr.f32.gmra.mrb[0].mxu0 %v399
  %v467 = vpop.f32.mrb[0].mxu0
  %v468 = vadd.f32 %v396, %v467
  %v469 = vpop.f32.mrb[0].mxu0
  %470 = vdwg.mxu0
  %v471 = vtanh.pop %v468
  %v473 = vsel %vm168, %v471, 0
  %475 = vmatprep.subr.mxu0 0.0
  %476 = vmatpush1.msra.mxu0 %v48
  %477 = vmatprep.subr.mxu0 0.0
  %478 = vmatpush1.msra.mxu0 %v49
  %479 = vmatprep.subr.mxu0 0.0
  %480 = vmatpush1.msra.mxu0 %v50
  %481 = vmatprep.subr.mxu0 0.0
  %482 = vmatpush1.msra.mxu0 %v51
  %483 = vmatprep.subr.mxu0 0.0
  %484 = vmatpush1.msra.mxu0 0.0
  %485 = vmatprep.subr.mxu0 0.0
  %486 = vmatpush1.msra.mxu0 0.0
  %487 = vmatprep.subr.mxu0 0.0
  %488 = vmatpush1.msra.mxu0 0.0
  %489 = vmatprep.subr.mxu0 0.0
  %490 = vmatpush1.msra.mxu0 0.0
  %491 = vmatprep.subr.mxu0 0.0
  %492 = vmatpush1.msra.mxu0 0.0
  %493 = vmatprep.subr.mxu0 0.0
  %494 = vmatpush1.msra.mxu0 0.0
  %495 = vmatprep.subr.mxu0 0.0
  %496 = vmatpush1.msra.mxu0 0.0
  %497 = vmatprep.subr.mxu0 0.0
  %498 = vmatpush1.msra.mxu0 0.0
  %499 = vmatprep.subr.mxu0 0.0
  %500 = vmatpush1.msra.mxu0 0.0
  %501 = vmatprep.subr.mxu0 0.0
  %502 = vmatpush1.msra.mxu0 0.0
  %503 = vmatprep.subr.mxu0 0.0
  %504 = vmatpush1.msra.mxu0 0.0
  %505 = vmatprep.subr.mxu0 0.0
  %506 = vmatpush1.msra.mxu0 0.0
  %507 = vmatprep.subr.mxu0 0.0
  %508 = vmatpush1.msra.mxu0 0.0
  %509 = vmatprep.subr.mxu0 0.0
  %510 = vmatpush1.msra.mxu0 0.0
  %511 = vmatprep.subr.mxu0 0.0
  %512 = vmatpush1.msra.mxu0 0.0
  %513 = vmatprep.subr.mxu0 0.0
  %514 = vmatpush1.msra.mxu0 0.0
  %515 = vmatprep.subr.mxu0 0.0
  %516 = vmatpush1.msra.mxu0 0.0
  %517 = vmatprep.subr.mxu0 0.0
  %518 = vmatpush1.msra.mxu0 0.0
  %519 = vmatprep.subr.mxu0 0.0
  %520 = vmatpush1.msra.mxu0 0.0
  %521 = vmatprep.subr.mxu0 0.0
  %522 = vmatpush1.msra.mxu0 0.0
  %523 = vmatprep.subr.mxu0 0.0
  %524 = vmatpush1.msra.mxu0 0.0
  %525 = vmatprep.subr.mxu0 0.0
  %526 = vmatpush1.msra.mxu0 0.0
  %527 = vmatprep.subr.mxu0 0.0
  %528 = vmatpush1.msra.mxu0 0.0
  %529 = vmatprep.subr.mxu0 0.0
  %530 = vmatpush1.msra.mxu0 0.0
  %531 = vmatprep.subr.mxu0 0.0
  %532 = vmatpush1.msra.mxu0 0.0
  %533 = vmatprep.subr.mxu0 0.0
  %534 = vmatpush1.msra.mxu0 0.0
  %535 = vmatprep.subr.mxu0 0.0
  %536 = vmatpush1.msra.mxu0 0.0
  %537 = vmatprep.subr.mxu0 0.0
  %538 = vmatpush1.msra.mxu0 0.0
  %539 = vmatprep.mubr.f32.mxu0 0.0
  %540 = vmatmul.mubr.f32.gmra.mrb[0].mxu0 %v473
  %v541 = vpop.f32.mrb[0].mxu0
  %v542 = vadd.f32 %v165, %v541
  %v543 = vpop.f32.mrb[0].mxu0
  %544 = vdwg.mxu0
  %v545 = vtanh.pop %v542
  %v547 = vrot.slane %v165, 2
  %v550 = vsel %vm168, %v545, 0
  %552 = vmatprep.subr.mxu0 0.0
  %553 = vmatpush1.msra.mxu0 %v48
  %554 = vmatprep.subr.mxu0 0.0
  %555 = vmatpush1.msra.mxu0 %v49
  %556 = vmatprep.subr.mxu0 0.0
  %557 = vmatpush1.msra.mxu0 %v50
  %558 = vmatprep.subr.mxu0 0.0
  %559 = vmatpush1.msra.mxu0 %v51
  %560 = vmatprep.subr.mxu0 0.0
  %561 = vmatpush1.msra.mxu0 0.0
  %562 = vmatprep.subr.mxu0 0.0
  %563 = vmatpush1.msra.mxu0 0.0
  %564 = vmatprep.subr.mxu0 0.0
  %565 = vmatpush1.msra.mxu0 0.0
  %566 = vmatprep.subr.mxu0 0.0
  %567 = vmatpush1.msra.mxu0 0.0
  %568 = vmatprep.subr.mxu0 0.0
  %569 = vmatpush1.msra.mxu0 0.0
  %570 = vmatprep.subr.mxu0 0.0
  %571 = vmatpush1.msra.mxu0 0.0
  %572 = vmatprep.subr.mxu0 0.0
  %573 = vmatpush1.msra.mxu0 0.0
  %574 = vmatprep.subr.mxu0 0.0
  %575 = vmatpush1.msra.mxu0 0.0
  %576 = vmatprep.subr.mxu0 0.0
  %577 = vmatpush1.msra.mxu0 0.0
  %578 = vmatprep.subr.mxu0 0.0
  %579 = vmatpush1.msra.mxu0 0.0
  %580 = vmatprep.subr.mxu0 0.0
  %581 = vmatpush1.msra.mxu0 0.0
  %582 = vmatprep.subr.mxu0 0.0
  %583 = vmatpush1.msra.mxu0 0.0
  %584 = vmatprep.subr.mxu0 0.0
  %585 = vmatpush1.msra.mxu0 0.0
  %586 = vmatprep.subr.mxu0 0.0
  %587 = vmatpush1.msra.mxu0 0.0
  %588 = vmatprep.subr.mxu0 0.0
  %589 = vmatpush1.msra.mxu0 0.0
  %590 = vmatprep.subr.mxu0 0.0
  %591 = vmatpush1.msra.mxu0 0.0
  %592 = vmatprep.subr.mxu0 0.0
  %593 = vmatpush1.msra.mxu0 0.0
  %594 = vmatprep.subr.mxu0 0.0
  %595 = vmatpush1.msra.mxu0 0.0
  %596 = vmatprep.subr.mxu0 0.0
  %597 = vmatpush1.msra.mxu0 0.0
  %598 = vmatprep.subr.mxu0 0.0
  %599 = vmatpush1.msra.mxu0 0.0
  %600 = vmatprep.subr.mxu0 0.0
  %601 = vmatpush1.msra.mxu0 0.0
  %602 = vmatprep.subr.mxu0 0.0
  %603 = vmatpush1.msra.mxu0 0.0
  %604 = vmatprep.subr.mxu0 0.0
  %605 = vmatpush1.msra.mxu0 0.0
  %606 = vmatprep.subr.mxu0 0.0
  %607 = vmatpush1.msra.mxu0 0.0
  %608 = vmatprep.subr.mxu0 0.0
  %609 = vmatpush1.msra.mxu0 0.0
  %610 = vmatprep.subr.mxu0 0.0
  %611 = vmatpush1.msra.mxu0 0.0
  %612 = vmatprep.subr.mxu0 0.0
  %613 = vmatpush1.msra.mxu0 0.0
  %614 = vmatprep.subr.mxu0 0.0
  %615 = vmatpush1.msra.mxu0 0.0
  %616 = vmatprep.mubr.f32.mxu0 0.0
  %617 = vmatmul.mubr.f32.gmra.mrb[0].mxu0 %v550
  %v618 = vpop.f32.mrb[0].mxu0
  %v619 = vadd.f32 %v547, %v618
  %v620 = vpop.f32.mrb[0].mxu0
  %621 = vdwg.mxu0
  %v622 = vtanh.pop %v619
  %v623 = vrot.slane %v165, 4
  %v626 = vsel %vm168, %v622, 0
  %628 = vmatprep.subr.mxu0 0.0
  %629 = vmatpush1.msra.mxu0 %v48
  %630 = vmatprep.subr.mxu0 0.0
  %631 = vmatpush1.msra.mxu0 %v49
  %632 = vmatprep.subr.mxu0 0.0
  %633 = vmatpush1.msra.mxu0 %v50
  %634 = vmatprep.subr.mxu0 0.0
  %635 = vmatpush1.msra.mxu0 %v51
  %636 = vmatprep.subr.mxu0 0.0
  %637 = vmatpush1.msra.mxu0 0.0
  %638 = vmatprep.subr.mxu0 0.0
  %639 = vmatpush1.msra.mxu0 0.0
  %640 = vmatprep.subr.mxu0 0.0
  %641 = vmatpush1.msra.mxu0 0.0
  %642 = vmatprep.subr.mxu0 0.0
  %643 = vmatpush1.msra.mxu0 0.0
  %644 = vmatprep.subr.mxu0 0.0
  %645 = vmatpush1.msra.mxu0 0.0
  %646 = vmatprep.subr.mxu0 0.0
  %647 = vmatpush1.msra.mxu0 0.0
  %648 = vmatprep.subr.mxu0 0.0
  %649 = vmatpush1.msra.mxu0 0.0
  %650 = vmatprep.subr.mxu0 0.0
  %651 = vmatpush1.msra.mxu0 0.0
  %652 = vmatprep.subr.mxu0 0.0
  %653 = vmatpush1.msra.mxu0 0.0
  %654 = vmatprep.subr.mxu0 0.0
  %655 = vmatpush1.msra.mxu0 0.0
  %656 = vmatprep.subr.mxu0 0.0
  %657 = vmatpush1.msra.mxu0 0.0
  %658 = vmatprep.subr.mxu0 0.0
  %659 = vmatpush1.msra.mxu0 0.0
  %660 = vmatprep.subr.mxu0 0.0
  %661 = vmatpush1.msra.mxu0 0.0
  %662 = vmatprep.subr.mxu0 0.0
  %663 = vmatpush1.msra.mxu0 0.0
  %664 = vmatprep.subr.mxu0 0.0
  %665 = vmatpush1.msra.mxu0 0.0
  %666 = vmatprep.subr.mxu0 0.0
  %667 = vmatpush1.msra.mxu0 0.0
  %668 = vmatprep.subr.mxu0 0.0
  %669 = vmatpush1.msra.mxu0 0.0
  %670 = vmatprep.subr.mxu0 0.0
  %671 = vmatpush1.msra.mxu0 0.0
  %672 = vmatprep.subr.mxu0 0.0
  %673 = vmatpush1.msra.mxu0 0.0
  %674 = vmatprep.subr.mxu0 0.0
  %675 = vmatpush1.msra.mxu0 0.0
  %676 = vmatprep.subr.mxu0 0.0
  %677 = vmatpush1.msra.mxu0 0.0
  %678 = vmatprep.subr.mxu0 0.0
  %679 = vmatpush1.msra.mxu0 0.0
  %680 = vmatprep.subr.mxu0 0.0
  %681 = vmatpush1.msra.mxu0 0.0
  %682 = vmatprep.subr.mxu0 0.0
  %683 = vmatpush1.msra.mxu0 0.0
  %684 = vmatprep.subr.mxu0 0.0
  %685 = vmatpush1.msra.mxu0 0.0
  %686 = vmatprep.subr.mxu0 0.0
  %687 = vmatpush1.msra.mxu0 0.0
  %688 = vmatprep.subr.mxu0 0.0
  %689 = vmatpush1.msra.mxu0 0.0
  %690 = vmatprep.subr.mxu0 0.0
  %691 = vmatpush1.msra.mxu0 0.0
  %692 = vmatprep.mubr.f32.mxu0 0.0
  %693 = vmatmul.mubr.f32.gmra.mrb[0].mxu0 %v626
  %v694 = vpop.f32.mrb[0].mxu0
  %v695 = vadd.f32 %v623, %v694
  %v696 = vpop.f32.mrb[0].mxu0
  %697 = vdwg.mxu0
  %v698 = vtanh.pop %v695
  %v699 = vrot.slane %v165, 6
  %v702 = vsel %vm168, %v698, 0
  %704 = vmatprep.subr.mxu0 0.0
  %705 = vmatpush1.msra.mxu0 %v48
  %706 = vmatprep.subr.mxu0 0.0
  %707 = vmatpush1.msra.mxu0 %v49
  %708 = vmatprep.subr.mxu0 0.0
  %709 = vmatpush1.msra.mxu0 %v50
  %710 = vmatprep.subr.mxu0 0.0
  %711 = vmatpush1.msra.mxu0 %v51
  %712 = vmatprep.subr.mxu0 0.0
  %713 = vmatpush1.msra.mxu0 0.0
  %714 = vmatprep.subr.mxu0 0.0
  %715 = vmatpush1.msra.mxu0 0.0
  %716 = vmatprep.subr.mxu0 0.0
  %717 = vmatpush1.msra.mxu0 0.0
  %718 = vmatprep.subr.mxu0 0.0
  %719 = vmatpush1.msra.mxu0 0.0
  %720 = vmatprep.subr.mxu0 0.0
  %721 = vmatpush1.msra.mxu0 0.0
  %722 = vmatprep.subr.mxu0 0.0
  %723 = vmatpush1.msra.mxu0 0.0
  %724 = vmatprep.subr.mxu0 0.0
  %725 = vmatpush1.msra.mxu0 0.0
  %726 = vmatprep.subr.mxu0 0.0
  %727 = vmatpush1.msra.mxu0 0.0
  %728 = vmatprep.subr.mxu0 0.0
  %729 = vmatpush1.msra.mxu0 0.0
  %730 = vmatprep.subr.mxu0 0.0
  %731 = vmatpush1.msra.mxu0 0.0
  %732 = vmatprep.subr.mxu0 0.0
  %733 = vmatpush1.msra.mxu0 0.0
  %734 = vmatprep.subr.mxu0 0.0
  %735 = vmatpush1.msra.mxu0 0.0
  %736 = vmatprep.subr.mxu0 0.0
  %737 = vmatpush1.msra.mxu0 0.0
  %738 = vmatprep.subr.mxu0 0.0
  %739 = vmatpush1.msra.mxu0 0.0
  %740 = vmatprep.subr.mxu0 0.0
  %741 = vmatpush1.msra.mxu0 0.0
  %742 = vmatprep.subr.mxu0 0.0
  %743 = vmatpush1.msra.mxu0 0.0
  %744 = vmatprep.subr.mxu0 0.0
  %745 = vmatpush1.msra.mxu0 0.0
  %746 = vmatprep.subr.mxu0 0.0
  %747 = vmatpush1.msra.mxu0 0.0
  %748 = vmatprep.subr.mxu0 0.0
  %749 = vmatpush1.msra.mxu0 0.0
  %750 = vmatprep.subr.mxu0 0.0
  %751 = vmatpush1.msra.mxu0 0.0
  %752 = vmatprep.subr.mxu0 0.0
  %753 = vmatpush1.msra.mxu0 0.0
  %754 = vmatprep.subr.mxu0 0.0
  %755 = vmatpush1.msra.mxu0 0.0
  %756 = vmatprep.subr.mxu0 0.0
  %757 = vmatpush1.msra.mxu0 0.0
  %758 = vmatprep.subr.mxu0 0.0
  %759 = vmatpush1.msra.mxu0 0.0
  %760 = vmatprep.subr.mxu0 0.0
  %761 = vmatpush1.msra.mxu0 0.0
  %762 = vmatprep.subr.mxu0 0.0
  %763 = vmatpush1.msra.mxu0 0.0
  %764 = vmatprep.subr.mxu0 0.0
  %765 = vmatpush1.msra.mxu0 0.0
  %766 = vmatprep.subr.mxu0 0.0
  %767 = vmatpush1.msra.mxu0 0.0
  %768 = vmatprep.mubr.f32.mxu0 0.0
  %769 = vmatmul.mubr.f32.gmra.mrb[0].mxu0 %v702
  %v770 = vpop.f32.mrb[0].mxu0
  %v771 = vadd.f32 %v699, %v770
  %v772 = vpop.f32.mrb[0].mxu0
  %773 = vdwg.mxu0
  %v774 = vtanh.pop %v771
  %v775 = vrot.slane %v319, 6
  %v777 = vrot.slane %v395, 4
  %v779 = vrot.slane %v471, 2
  %v781 = vrot.slane %v622, 6
  %v783 = vrot.slane %v698, 4
  %v786 = vrot.slane %v774, 2
  %vm788 = vcmask 1041408
  %v789 = vsel %vm788, %v242, %v775
  %v790 = vsel %vm89, %v789, %v777
  %vm791 = vcmask 1045504
  %v792 = vsel %vm791, %v790, %v779
  %v793 = vsel %vm788, %v545, %v781
  %v794 = vsel %vm89, %v793, %v783
  %v795 = vsel %vm791, %v794, %v786
  %v797 = vlaneseq
  %v798 = vshrl.u32 %v797, 7
  %v799 = vsub.s32 0, %v798
  %v800 = vrot.slane %v61, %v799
  %v803 = vsel %vm168, %v792, 0
  %v806 = vsel %vm168, %v795, 0
  %808 = vmatprep.subr.mxu0 0.0
  %809 = vmatpush1.msra.mxu0 %v53
  %810 = vmatprep.subr.mxu0 0.0
  %811 = vmatpush1.msra.mxu0 %v54
  %812 = vmatprep.subr.mxu0 0.0
  %813 = vmatpush1.msra.mxu0 %v55
  %814 = vmatprep.subr.mxu0 0.0
  %815 = vmatpush1.msra.mxu0 %v56
  %816 = vmatprep.subr.mxu0 0.0
  %817 = vmatpush1.msra.mxu0 0.0
  %818 = vmatprep.subr.mxu0 0.0
  %819 = vmatpush1.msra.mxu0 0.0
  %820 = vmatprep.subr.mxu0 0.0
  %821 = vmatpush1.msra.mxu0 0.0
  %822 = vmatprep.subr.mxu0 0.0
  %823 = vmatpush1.msra.mxu0 0.0
  %824 = vmatprep.subr.mxu0 0.0
  %825 = vmatpush1.msra.mxu0 0.0
  %826 = vmatprep.subr.mxu0 0.0
  %827 = vmatpush1.msra.mxu0 0.0
  %828 = vmatprep.subr.mxu0 0.0
  %829 = vmatpush1.msra.mxu0 0.0
  %830 = vmatprep.subr.mxu0 0.0
  %831 = vmatpush1.msra.mxu0 0.0
  %832 = vmatprep.subr.mxu0 0.0
  %833 = vmatpush1.msra.mxu0 0.0
  %834 = vmatprep.subr.mxu0 0.0
  %835 = vmatpush1.msra.mxu0 0.0
  %836 = vmatprep.subr.mxu0 0.0
  %837 = vmatpush1.msra.mxu0 0.0
  %838 = vmatprep.subr.mxu0 0.0
  %839 = vmatpush1.msra.mxu0 0.0
  %840 = vmatprep.subr.mxu0 0.0
  %841 = vmatpush1.msra.mxu0 0.0
  %842 = vmatprep.subr.mxu0 0.0
  %843 = vmatpush1.msra.mxu0 0.0
  %844 = vmatprep.subr.mxu0 0.0
  %845 = vmatpush1.msra.mxu0 0.0
  %846 = vmatprep.subr.mxu0 0.0
  %847 = vmatpush1.msra.mxu0 0.0
  %848 = vmatprep.subr.mxu0 0.0
  %849 = vmatpush1.msra.mxu0 0.0
  %850 = vmatprep.subr.mxu0 0.0
  %851 = vmatpush1.msra.mxu0 0.0
  %852 = vmatprep.subr.mxu0 0.0
  %853 = vmatpush1.msra.mxu0 0.0
  %854 = vmatprep.subr.mxu0 0.0
  %855 = vmatpush1.msra.mxu0 0.0
  %856 = vmatprep.subr.mxu0 0.0
  %857 = vmatpush1.msra.mxu0 0.0
  %858 = vmatprep.subr.mxu0 0.0
  %859 = vmatpush1.msra.mxu0 0.0
  %860 = vmatprep.subr.mxu0 0.0
  %861 = vmatpush1.msra.mxu0 0.0
  %862 = vmatprep.subr.mxu0 0.0
  %863 = vmatpush1.msra.mxu0 0.0
  %864 = vmatprep.subr.mxu0 0.0
  %865 = vmatpush1.msra.mxu0 0.0
  %866 = vmatprep.subr.mxu0 0.0
  %867 = vmatpush1.msra.mxu0 0.0
  %868 = vmatprep.subr.mxu0 0.0
  %869 = vmatpush1.msra.mxu0 0.0
  %870 = vmatprep.subr.mxu0 0.0
  %871 = vmatpush1.msra.mxu0 0.0
  %872 = vmatprep.mubr.f32.mxu0 0.0
  %873 = vmatmul.mubr.f32.gmra.mrb[0].mxu0 %v803
  %v874 = vpop.f32.mrb[0].mxu0
  %v875 = vadd.f32 %v800, %v874
  %v876 = vpop.f32.mrb[0].mxu0
  %877 = vmatprep.mubr.f32.mxu0 0.0
  %878 = vmatmul.mubr.f32.gmra.mrb[0].mxu0 %v806
  %v879 = vpop.f32.mrb[0].mxu0
  %v880 = vadd.f32 %v800, %v879
  %v881 = vpop.f32.mrb[0].mxu0
  %882 = vdwg.mxu0
  %883 = vmatprep.subr.mxu0 0.0
  %884 = vmatpush1.msra.mxu0 %v57
  %885 = vmatprep.subr.mxu0 0.0
  %886 = vmatpush1.msra.mxu0 %v58
  %887 = vmatprep.subr.mxu0 0.0
  %888 = vmatpush1.msra.mxu0 %v59
  %889 = vmatprep.subr.mxu0 0.0
  %890 = vmatpush1.msra.mxu0 %v60
  %891 = vmatprep.subr.mxu0 0.0
  %892 = vmatpush1.msra.mxu0 0.0
  %893 = vmatprep.subr.mxu0 0.0
  %894 = vmatpush1.msra.mxu0 0.0
  %895 = vmatprep.subr.mxu0 0.0
  %896 = vmatpush1.msra.mxu0 0.0
  %897 = vmatprep.subr.mxu0 0.0
  %898 = vmatpush1.msra.mxu0 0.0
  %899 = vmatprep.subr.mxu0 0.0
  %900 = vmatpush1.msra.mxu0 0.0
  %901 = vmatprep.subr.mxu0 0.0
  %902 = vmatpush1.msra.mxu0 0.0
  %903 = vmatprep.subr.mxu0 0.0
  %904 = vmatpush1.msra.mxu0 0.0
  %905 = vmatprep.subr.mxu0 0.0
  %906 = vmatpush1.msra.mxu0 0.0
  %907 = vmatprep.subr.mxu0 0.0
  %908 = vmatpush1.msra.mxu0 0.0
  %909 = vmatprep.subr.mxu0 0.0
  %910 = vmatpush1.msra.mxu0 0.0
  %911 = vmatprep.subr.mxu0 0.0
  %912 = vmatpush1.msra.mxu0 0.0
  %913 = vmatprep.subr.mxu0 0.0
  %914 = vmatpush1.msra.mxu0 0.0
  %915 = vmatprep.subr.mxu0 0.0
  %916 = vmatpush1.msra.mxu0 0.0
  %917 = vmatprep.subr.mxu0 0.0
  %918 = vmatpush1.msra.mxu0 0.0
  %919 = vmatprep.subr.mxu0 0.0
  %920 = vmatpush1.msra.mxu0 0.0
  %921 = vmatprep.subr.mxu0 0.0
  %922 = vmatpush1.msra.mxu0 0.0
  %923 = vmatprep.subr.mxu0 0.0
  %924 = vmatpush1.msra.mxu0 0.0
  %925 = vmatprep.subr.mxu0 0.0
  %926 = vmatpush1.msra.mxu0 0.0
  %927 = vmatprep.subr.mxu0 0.0
  %928 = vmatpush1.msra.mxu0 0.0
  %929 = vmatprep.subr.mxu0 0.0
  %930 = vmatpush1.msra.mxu0 0.0
  %931 = vmatprep.subr.mxu0 0.0
  %932 = vmatpush1.msra.mxu0 0.0
  %933 = vmatprep.subr.mxu0 0.0
  %934 = vmatpush1.msra.mxu0 0.0
  %935 = vmatprep.subr.mxu0 0.0
  %936 = vmatpush1.msra.mxu0 0.0
  %937 = vmatprep.subr.mxu0 0.0
  %938 = vmatpush1.msra.mxu0 0.0
  %939 = vmatprep.subr.mxu0 0.0
  %940 = vmatpush1.msra.mxu0 0.0
  %941 = vmatprep.subr.mxu0 0.0
  %942 = vmatpush1.msra.mxu0 0.0
  %943 = vmatprep.subr.mxu0 0.0
  %944 = vmatpush1.msra.mxu0 0.0
  %945 = vmatprep.subr.mxu0 0.0
  %946 = vmatpush1.msra.mxu0 0.0
  %947 = vmatprep.mubr.f32.mxu0 0.0
  %948 = vmatmul.mubr.f32.gmra.mrb[0].mxu0 %v170
  %v949 = vpop.f32.mrb[0].mxu0
  %v950 = vadd.f32 %v875, %v949
  %v951 = vpop.f32.mrb[0].mxu0
  %952 = vdwg.mxu0
  %v953 = vtanh.pop %v950
  %v955 = vrot.slane %v875, 2
  %v958 = vsel %vm168, %v953, 0
  %960 = vmatprep.subr.mxu0 0.0
  %961 = vmatpush1.msra.mxu0 %v57
  %962 = vmatprep.subr.mxu0 0.0
  %963 = vmatpush1.msra.mxu0 %v58
  %964 = vmatprep.subr.mxu0 0.0
  %965 = vmatpush1.msra.mxu0 %v59
  %966 = vmatprep.subr.mxu0 0.0
  %967 = vmatpush1.msra.mxu0 %v60
  %968 = vmatprep.subr.mxu0 0.0
  %969 = vmatpush1.msra.mxu0 0.0
  %970 = vmatprep.subr.mxu0 0.0
  %971 = vmatpush1.msra.mxu0 0.0
  %972 = vmatprep.subr.mxu0 0.0
  %973 = vmatpush1.msra.mxu0 0.0
  %974 = vmatprep.subr.mxu0 0.0
  %975 = vmatpush1.msra.mxu0 0.0
  %976 = vmatprep.subr.mxu0 0.0
  %977 = vmatpush1.msra.mxu0 0.0
  %978 = vmatprep.subr.mxu0 0.0
  %979 = vmatpush1.msra.mxu0 0.0
  %980 = vmatprep.subr.mxu0 0.0
  %981 = vmatpush1.msra.mxu0 0.0
  %982 = vmatprep.subr.mxu0 0.0
  %983 = vmatpush1.msra.mxu0 0.0
  %984 = vmatprep.subr.mxu0 0.0
  %985 = vmatpush1.msra.mxu0 0.0
  %986 = vmatprep.subr.mxu0 0.0
  %987 = vmatpush1.msra.mxu0 0.0
  %988 = vmatprep.subr.mxu0 0.0
  %989 = vmatpush1.msra.mxu0 0.0
  %990 = vmatprep.subr.mxu0 0.0
  %991 = vmatpush1.msra.mxu0 0.0
  %992 = vmatprep.subr.mxu0 0.0
  %993 = vmatpush1.msra.mxu0 0.0
  %994 = vmatprep.subr.mxu0 0.0
  %995 = vmatpush1.msra.mxu0 0.0
  %996 = vmatprep.subr.mxu0 0.0
  %997 = vmatpush1.msra.mxu0 0.0
  %998 = vmatprep.subr.mxu0 0.0
  %999 = vmatpush1.msra.mxu0 0.0
  %1000 = vmatprep.subr.mxu0 0.0
  %1001 = vmatpush1.msra.mxu0 0.0
  %1002 = vmatprep.subr.mxu0 0.0
  %1003 = vmatpush1.msra.mxu0 0.0
  %1004 = vmatprep.subr.mxu0 0.0
  %1005 = vmatpush1.msra.mxu0 0.0
  %1006 = vmatprep.subr.mxu0 0.0
  %1007 = vmatpush1.msra.mxu0 0.0
  %1008 = vmatprep.subr.mxu0 0.0
  %1009 = vmatpush1.msra.mxu0 0.0
  %1010 = vmatprep.subr.mxu0 0.0
  %1011 = vmatpush1.msra.mxu0 0.0
  %1012 = vmatprep.subr.mxu0 0.0
  %1013 = vmatpush1.msra.mxu0 0.0
  %1014 = vmatprep.subr.mxu0 0.0
  %1015 = vmatpush1.msra.mxu0 0.0
  %1016 = vmatprep.subr.mxu0 0.0
  %1017 = vmatpush1.msra.mxu0 0.0
  %1018 = vmatprep.subr.mxu0 0.0
  %1019 = vmatpush1.msra.mxu0 0.0
  %1020 = vmatprep.subr.mxu0 0.0
  %1021 = vmatpush1.msra.mxu0 0.0
  %1022 = vmatprep.subr.mxu0 0.0
  %1023 = vmatpush1.msra.mxu0 0.0
  %1024 = vmatprep.mubr.f32.mxu0 0.0
  %1025 = vmatmul.mubr.f32.gmra.mrb[0].mxu0 %v958
  %v1026 = vpop.f32.mrb[0].mxu0
  %v1027 = vadd.f32 %v955, %v1026
  %v1028 = vpop.f32.mrb[0].mxu0
  %1029 = vdwg.mxu0
  %v1030 = vtanh.pop %v1027
  %v1031 = vrot.slane %v875, 4
  %v1034 = vsel %vm168, %v1030, 0
  %1036 = vmatprep.subr.mxu0 0.0
  %1037 = vmatpush1.msra.mxu0 %v57
  %1038 = vmatprep.subr.mxu0 0.0
  %1039 = vmatpush1.msra.mxu0 %v58
  %1040 = vmatprep.subr.mxu0 0.0
  %1041 = vmatpush1.msra.mxu0 %v59
  %1042 = vmatprep.subr.mxu0 0.0
  %1043 = vmatpush1.msra.mxu0 %v60
  %1044 = vmatprep.subr.mxu0 0.0
  %1045 = vmatpush1.msra.mxu0 0.0
  %1046 = vmatprep.subr.mxu0 0.0
  %1047 = vmatpush1.msra.mxu0 0.0
  %1048 = vmatprep.subr.mxu0 0.0
  %1049 = vmatpush1.msra.mxu0 0.0
  %1050 = vmatprep.subr.mxu0 0.0
  %1051 = vmatpush1.msra.mxu0 0.0
  %1052 = vmatprep.subr.mxu0 0.0
  %1053 = vmatpush1.msra.mxu0 0.0
  %1054 = vmatprep.subr.mxu0 0.0
  %1055 = vmatpush1.msra.mxu0 0.0
  %1056 = vmatprep.subr.mxu0 0.0
  %1057 = vmatpush1.msra.mxu0 0.0
  %1058 = vmatprep.subr.mxu0 0.0
  %1059 = vmatpush1.msra.mxu0 0.0
  %1060 = vmatprep.subr.mxu0 0.0
  %1061 = vmatpush1.msra.mxu0 0.0
  %1062 = vmatprep.subr.mxu0 0.0
  %1063 = vmatpush1.msra.mxu0 0.0
  %1064 = vmatprep.subr.mxu0 0.0
  %1065 = vmatpush1.msra.mxu0 0.0
  %1066 = vmatprep.subr.mxu0 0.0
  %1067 = vmatpush1.msra.mxu0 0.0
  %1068 = vmatprep.subr.mxu0 0.0
  %1069 = vmatpush1.msra.mxu0 0.0
  %1070 = vmatprep.subr.mxu0 0.0
  %1071 = vmatpush1.msra.mxu0 0.0
  %1072 = vmatprep.subr.mxu0 0.0
  %1073 = vmatpush1.msra.mxu0 0.0
  %1074 = vmatprep.subr.mxu0 0.0
  %1075 = vmatpush1.msra.mxu0 0.0
  %1076 = vmatprep.subr.mxu0 0.0
  %1077 = vmatpush1.msra.mxu0 0.0
  %1078 = vmatprep.subr.mxu0 0.0
  %1079 = vmatpush1.msra.mxu0 0.0
  %1080 = vmatprep.subr.mxu0 0.0
  %1081 = vmatpush1.msra.mxu0 0.0
  %1082 = vmatprep.subr.mxu0 0.0
  %1083 = vmatpush1.msra.mxu0 0.0
  %1084 = vmatprep.subr.mxu0 0.0
  %1085 = vmatpush1.msra.mxu0 0.0
  %1086 = vmatprep.subr.mxu0 0.0
  %1087 = vmatpush1.msra.mxu0 0.0
  %1088 = vmatprep.subr.mxu0 0.0
  %1089 = vmatpush1.msra.mxu0 0.0
  %1090 = vmatprep.subr.mxu0 0.0
  %1091 = vmatpush1.msra.mxu0 0.0
  %1092 = vmatprep.subr.mxu0 0.0
  %1093 = vmatpush1.msra.mxu0 0.0
  %1094 = vmatprep.subr.mxu0 0.0
  %1095 = vmatpush1.msra.mxu0 0.0
  %1096 = vmatprep.subr.mxu0 0.0
  %1097 = vmatpush1.msra.mxu0 0.0
  %1098 = vmatprep.subr.mxu0 0.0
  %1099 = vmatpush1.msra.mxu0 0.0
  %1100 = vmatprep.mubr.f32.mxu0 0.0
  %1101 = vmatmul.mubr.f32.gmra.mrb[0].mxu0 %v1034
  %v1102 = vpop.f32.mrb[0].mxu0
  %v1103 = vadd.f32 %v1031, %v1102
  %v1104 = vpop.f32.mrb[0].mxu0
  %1105 = vdwg.mxu0
  %v1106 = vtanh.pop %v1103
  %v1107 = vrot.slane %v875, 6
  %v1110 = vsel %vm168, %v1106, 0
  %1112 = vmatprep.subr.mxu0 0.0
  %1113 = vmatpush1.msra.mxu0 %v57
  %1114 = vmatprep.subr.mxu0 0.0
  %1115 = vmatpush1.msra.mxu0 %v58
  %1116 = vmatprep.subr.mxu0 0.0
  %1117 = vmatpush1.msra.mxu0 %v59
  %1118 = vmatprep.subr.mxu0 0.0
  %1119 = vmatpush1.msra.mxu0 %v60
  %1120 = vmatprep.subr.mxu0 0.0
  %1121 = vmatpush1.msra.mxu0 0.0
  %1122 = vmatprep.subr.mxu0 0.0
  %1123 = vmatpush1.msra.mxu0 0.0
  %1124 = vmatprep.subr.mxu0 0.0
  %1125 = vmatpush1.msra.mxu0 0.0
  %1126 = vmatprep.subr.mxu0 0.0
  %1127 = vmatpush1.msra.mxu0 0.0
  %1128 = vmatprep.subr.mxu0 0.0
  %1129 = vmatpush1.msra.mxu0 0.0
  %1130 = vmatprep.subr.mxu0 0.0
  %1131 = vmatpush1.msra.mxu0 0.0
  %1132 = vmatprep.subr.mxu0 0.0
  %1133 = vmatpush1.msra.mxu0 0.0
  %1134 = vmatprep.subr.mxu0 0.0
  %1135 = vmatpush1.msra.mxu0 0.0
  %1136 = vmatprep.subr.mxu0 0.0
  %1137 = vmatpush1.msra.mxu0 0.0
  %1138 = vmatprep.subr.mxu0 0.0
  %1139 = vmatpush1.msra.mxu0 0.0
  %1140 = vmatprep.subr.mxu0 0.0
  %1141 = vmatpush1.msra.mxu0 0.0
  %1142 = vmatprep.subr.mxu0 0.0
  %1143 = vmatpush1.msra.mxu0 0.0
  %1144 = vmatprep.subr.mxu0 0.0
  %1145 = vmatpush1.msra.mxu0 0.0
  %1146 = vmatprep.subr.mxu0 0.0
  %1147 = vmatpush1.msra.mxu0 0.0
  %1148 = vmatprep.subr.mxu0 0.0
  %1149 = vmatpush1.msra.mxu0 0.0
  %1150 = vmatprep.subr.mxu0 0.0
  %1151 = vmatpush1.msra.mxu0 0.0
  %1152 = vmatprep.subr.mxu0 0.0
  %1153 = vmatpush1.msra.mxu0 0.0
  %1154 = vmatprep.subr.mxu0 0.0
  %1155 = vmatpush1.msra.mxu0 0.0
  %1156 = vmatprep.subr.mxu0 0.0
  %1157 = vmatpush1.msra.mxu0 0.0
  %1158 = vmatprep.subr.mxu0 0.0
  %1159 = vmatpush1.msra.mxu0 0.0
  %1160 = vmatprep.subr.mxu0 0.0
  %1161 = vmatpush1.msra.mxu0 0.0
  %1162 = vmatprep.subr.mxu0 0.0
  %1163 = vmatpush1.msra.mxu0 0.0
  %1164 = vmatprep.subr.mxu0 0.0
  %1165 = vmatpush1.msra.mxu0 0.0
  %1166 = vmatprep.subr.mxu0 0.0
  %1167 = vmatpush1.msra.mxu0 0.0
  %1168 = vmatprep.subr.mxu0 0.0
  %1169 = vmatpush1.msra.mxu0 0.0
  %1170 = vmatprep.subr.mxu0 0.0
  %1171 = vmatpush1.msra.mxu0 0.0
  %1172 = vmatprep.subr.mxu0 0.0
  %1173 = vmatpush1.msra.mxu0 0.0
  %1174 = vmatprep.subr.mxu0 0.0
  %1175 = vmatpush1.msra.mxu0 0.0
  %1176 = vmatprep.mubr.f32.mxu0 0.0
  %1177 = vmatmul.mubr.f32.gmra.mrb[0].mxu0 %v1110
  %v1178 = vpop.f32.mrb[0].mxu0
  %v1179 = vadd.f32 %v1107, %v1178
  %v1180 = vpop.f32.mrb[0].mxu0
  %1181 = vdwg.mxu0
  %v1182 = vtanh.pop %v1179
  %v1184 = vsel %vm168, %v1182, 0
  %1186 = vmatprep.subr.mxu0 0.0
  %1187 = vmatpush1.msra.mxu0 %v57
  %1188 = vmatprep.subr.mxu0 0.0
  %1189 = vmatpush1.msra.mxu0 %v58
  %1190 = vmatprep.subr.mxu0 0.0
  %1191 = vmatpush1.msra.mxu0 %v59
  %1192 = vmatprep.subr.mxu0 0.0
  %1193 = vmatpush1.msra.mxu0 %v60
  %1194 = vmatprep.subr.mxu0 0.0
  %1195 = vmatpush1.msra.mxu0 0.0
  %1196 = vmatprep.subr.mxu0 0.0
  %1197 = vmatpush1.msra.mxu0 0.0
  %1198 = vmatprep.subr.mxu0 0.0
  %1199 = vmatpush1.msra.mxu0 0.0
  %1200 = vmatprep.subr.mxu0 0.0
  %1201 = vmatpush1.msra.mxu0 0.0
  %1202 = vmatprep.subr.mxu0 0.0
  %1203 = vmatpush1.msra.mxu0 0.0
  %1204 = vmatprep.subr.mxu0 0.0
  %1205 = vmatpush1.msra.mxu0 0.0
  %1206 = vmatprep.subr.mxu0 0.0
  %1207 = vmatpush1.msra.mxu0 0.0
  %1208 = vmatprep.subr.mxu0 0.0
  %1209 = vmatpush1.msra.mxu0 0.0
  %1210 = vmatprep.subr.mxu0 0.0
  %1211 = vmatpush1.msra.mxu0 0.0
  %1212 = vmatprep.subr.mxu0 0.0
  %1213 = vmatpush1.msra.mxu0 0.0
  %1214 = vmatprep.subr.mxu0 0.0
  %1215 = vmatpush1.msra.mxu0 0.0
  %1216 = vmatprep.subr.mxu0 0.0
  %1217 = vmatpush1.msra.mxu0 0.0
  %1218 = vmatprep.subr.mxu0 0.0
  %1219 = vmatpush1.msra.mxu0 0.0
  %1220 = vmatprep.subr.mxu0 0.0
  %1221 = vmatpush1.msra.mxu0 0.0
  %1222 = vmatprep.subr.mxu0 0.0
  %1223 = vmatpush1.msra.mxu0 0.0
  %1224 = vmatprep.subr.mxu0 0.0
  %1225 = vmatpush1.msra.mxu0 0.0
  %1226 = vmatprep.subr.mxu0 0.0
  %1227 = vmatpush1.msra.mxu0 0.0
  %1228 = vmatprep.subr.mxu0 0.0
  %1229 = vmatpush1.msra.mxu0 0.0
  %1230 = vmatprep.subr.mxu0 0.0
  %1231 = vmatpush1.msra.mxu0 0.0
  %1232 = vmatprep.subr.mxu0 0.0
  %1233 = vmatpush1.msra.mxu0 0.0
  %1234 = vmatprep.subr.mxu0 0.0
  %1235 = vmatpush1.msra.mxu0 0.0
  %1236 = vmatprep.subr.mxu0 0.0
  %1237 = vmatpush1.msra.mxu0 0.0
  %1238 = vmatprep.subr.mxu0 0.0
  %1239 = vmatpush1.msra.mxu0 0.0
  %1240 = vmatprep.subr.mxu0 0.0
  %1241 = vmatpush1.msra.mxu0 0.0
  %1242 = vmatprep.subr.mxu0 0.0
  %1243 = vmatpush1.msra.mxu0 0.0
  %1244 = vmatprep.subr.mxu0 0.0
  %1245 = vmatpush1.msra.mxu0 0.0
  %1246 = vmatprep.subr.mxu0 0.0
  %1247 = vmatpush1.msra.mxu0 0.0
  %1248 = vmatprep.subr.mxu0 0.0
  %1249 = vmatpush1.msra.mxu0 0.0
  %1250 = vmatprep.mubr.f32.mxu0 0.0
  %1251 = vmatmul.mubr.f32.gmra.mrb[0].mxu0 %v1184
  %v1252 = vpop.f32.mrb[0].mxu0
  %v1253 = vadd.f32 %v880, %v1252
  %v1254 = vpop.f32.mrb[0].mxu0
  %1255 = vdwg.mxu0
  %v1256 = vtanh.pop %v1253
  %v1258 = vrot.slane %v880, 2
  %v1261 = vsel %vm168, %v1256, 0
  %1263 = vmatprep.subr.mxu0 0.0
  %1264 = vmatpush1.msra.mxu0 %v57
  %1265 = vmatprep.subr.mxu0 0.0
  %1266 = vmatpush1.msra.mxu0 %v58
  %1267 = vmatprep.subr.mxu0 0.0
  %1268 = vmatpush1.msra.mxu0 %v59
  %1269 = vmatprep.subr.mxu0 0.0
  %1270 = vmatpush1.msra.mxu0 %v60
  %1271 = vmatprep.subr.mxu0 0.0
  %1272 = vmatpush1.msra.mxu0 0.0
  %1273 = vmatprep.subr.mxu0 0.0
  %1274 = vmatpush1.msra.mxu0 0.0
  %1275 = vmatprep.subr.mxu0 0.0
  %1276 = vmatpush1.msra.mxu0 0.0
  %1277 = vmatprep.subr.mxu0 0.0
  %1278 = vmatpush1.msra.mxu0 0.0
  %1279 = vmatprep.subr.mxu0 0.0
  %1280 = vmatpush1.msra.mxu0 0.0
  %1281 = vmatprep.subr.mxu0 0.0
  %1282 = vmatpush1.msra.mxu0 0.0
  %1283 = vmatprep.subr.mxu0 0.0
  %1284 = vmatpush1.msra.mxu0 0.0
  %1285 = vmatprep.subr.mxu0 0.0
  %1286 = vmatpush1.msra.mxu0 0.0
  %1287 = vmatprep.subr.mxu0 0.0
  %1288 = vmatpush1.msra.mxu0 0.0
  %1289 = vmatprep.subr.mxu0 0.0
  %1290 = vmatpush1.msra.mxu0 0.0
  %1291 = vmatprep.subr.mxu0 0.0
  %1292 = vmatpush1.msra.mxu0 0.0
  %1293 = vmatprep.subr.mxu0 0.0
  %1294 = vmatpush1.msra.mxu0 0.0
  %1295 = vmatprep.subr.mxu0 0.0
  %1296 = vmatpush1.msra.mxu0 0.0
  %1297 = vmatprep.subr.mxu0 0.0
  %1298 = vmatpush1.msra.mxu0 0.0
  %1299 = vmatprep.subr.mxu0 0.0
  %1300 = vmatpush1.msra.mxu0 0.0
  %1301 = vmatprep.subr.mxu0 0.0
  %1302 = vmatpush1.msra.mxu0 0.0
  %1303 = vmatprep.subr.mxu0 0.0
  %1304 = vmatpush1.msra.mxu0 0.0
  %1305 = vmatprep.subr.mxu0 0.0
  %1306 = vmatpush1.msra.mxu0 0.0
  %1307 = vmatprep.subr.mxu0 0.0
  %1308 = vmatpush1.msra.mxu0 0.0
  %1309 = vmatprep.subr.mxu0 0.0
  %1310 = vmatpush1.msra.mxu0 0.0
  %1311 = vmatprep.subr.mxu0 0.0
  %1312 = vmatpush1.msra.mxu0 0.0
  %1313 = vmatprep.subr.mxu0 0.0
  %1314 = vmatpush1.msra.mxu0 0.0
  %1315 = vmatprep.subr.mxu0 0.0
  %1316 = vmatpush1.msra.mxu0 0.0
  %1317 = vmatprep.subr.mxu0 0.0
  %1318 = vmatpush1.msra.mxu0 0.0
  %1319 = vmatprep.subr.mxu0 0.0
  %1320 = vmatpush1.msra.mxu0 0.0
  %1321 = vmatprep.subr.mxu0 0.0
  %1322 = vmatpush1.msra.mxu0 0.0
  %1323 = vmatprep.subr.mxu0 0.0
  %1324 = vmatpush1.msra.mxu0 0.0
  %1325 = vmatprep.subr.mxu0 0.0
  %1326 = vmatpush1.msra.mxu0 0.0
  %1327 = vmatprep.mubr.f32.mxu0 0.0
  %1328 = vmatmul.mubr.f32.gmra.mrb[0].mxu0 %v1261
  %v1329 = vpop.f32.mrb[0].mxu0
  %v1330 = vadd.f32 %v1258, %v1329
  %v1331 = vpop.f32.mrb[0].mxu0
  %1332 = vdwg.mxu0
  %v1333 = vtanh.pop %v1330
  %v1334 = vrot.slane %v880, 4
  %v1337 = vsel %vm168, %v1333, 0
  %1339 = vmatprep.subr.mxu0 0.0
  %1340 = vmatpush1.msra.mxu0 %v57
  %1341 = vmatprep.subr.mxu0 0.0
  %1342 = vmatpush1.msra.mxu0 %v58
  %1343 = vmatprep.subr.mxu0 0.0
  %1344 = vmatpush1.msra.mxu0 %v59
  %1345 = vmatprep.subr.mxu0 0.0
  %1346 = vmatpush1.msra.mxu0 %v60
  %1347 = vmatprep.subr.mxu0 0.0
  %1348 = vmatpush1.msra.mxu0 0.0
  %1349 = vmatprep.subr.mxu0 0.0
  %1350 = vmatpush1.msra.mxu0 0.0
  %1351 = vmatprep.subr.mxu0 0.0
  %1352 = vmatpush1.msra.mxu0 0.0
  %1353 = vmatprep.subr.mxu0 0.0
  %1354 = vmatpush1.msra.mxu0 0.0
  %1355 = vmatprep.subr.mxu0 0.0
  %1356 = vmatpush1.msra.mxu0 0.0
  %1357 = vmatprep.subr.mxu0 0.0
  %1358 = vmatpush1.msra.mxu0 0.0
  %1359 = vmatprep.subr.mxu0 0.0
  %1360 = vmatpush1.msra.mxu0 0.0
  %1361 = vmatprep.subr.mxu0 0.0
  %1362 = vmatpush1.msra.mxu0 0.0
  %1363 = vmatprep.subr.mxu0 0.0
  %1364 = vmatpush1.msra.mxu0 0.0
  %1365 = vmatprep.subr.mxu0 0.0
  %1366 = vmatpush1.msra.mxu0 0.0
  %1367 = vmatprep.subr.mxu0 0.0
  %1368 = vmatpush1.msra.mxu0 0.0
  %1369 = vmatprep.subr.mxu0 0.0
  %1370 = vmatpush1.msra.mxu0 0.0
  %1371 = vmatprep.subr.mxu0 0.0
  %1372 = vmatpush1.msra.mxu0 0.0
  %1373 = vmatprep.subr.mxu0 0.0
  %1374 = vmatpush1.msra.mxu0 0.0
  %1375 = vmatprep.subr.mxu0 0.0
  %1376 = vmatpush1.msra.mxu0 0.0
  %1377 = vmatprep.subr.mxu0 0.0
  %1378 = vmatpush1.msra.mxu0 0.0
  %1379 = vmatprep.subr.mxu0 0.0
  %1380 = vmatpush1.msra.mxu0 0.0
  %1381 = vmatprep.subr.mxu0 0.0
  %1382 = vmatpush1.msra.mxu0 0.0
  %1383 = vmatprep.subr.mxu0 0.0
  %1384 = vmatpush1.msra.mxu0 0.0
  %1385 = vmatprep.subr.mxu0 0.0
  %1386 = vmatpush1.msra.mxu0 0.0
  %1387 = vmatprep.subr.mxu0 0.0
  %1388 = vmatpush1.msra.mxu0 0.0
  %1389 = vmatprep.subr.mxu0 0.0
  %1390 = vmatpush1.msra.mxu0 0.0
  %1391 = vmatprep.subr.mxu0 0.0
  %1392 = vmatpush1.msra.mxu0 0.0
  %1393 = vmatprep.subr.mxu0 0.0
  %1394 = vmatpush1.msra.mxu0 0.0
  %1395 = vmatprep.subr.mxu0 0.0
  %1396 = vmatpush1.msra.mxu0 0.0
  %1397 = vmatprep.subr.mxu0 0.0
  %1398 = vmatpush1.msra.mxu0 0.0
  %1399 = vmatprep.subr.mxu0 0.0
  %1400 = vmatpush1.msra.mxu0 0.0
  %1401 = vmatprep.subr.mxu0 0.0
  %1402 = vmatpush1.msra.mxu0 0.0
  %1403 = vmatprep.mubr.f32.mxu0 0.0
  %1404 = vmatmul.mubr.f32.gmra.mrb[0].mxu0 %v1337
  %v1405 = vpop.f32.mrb[0].mxu0
  %v1406 = vadd.f32 %v1334, %v1405
  %v1407 = vpop.f32.mrb[0].mxu0
  %1408 = vdwg.mxu0
  %v1409 = vtanh.pop %v1406
  %v1410 = vrot.slane %v880, 6
  %v1413 = vsel %vm168, %v1409, 0
  %1415 = vmatprep.subr.mxu0 0.0
  %1416 = vmatpush1.msra.mxu0 %v57
  %1417 = vmatprep.subr.mxu0 0.0
  %1418 = vmatpush1.msra.mxu0 %v58
  %1419 = vmatprep.subr.mxu0 0.0
  %1420 = vmatpush1.msra.mxu0 %v59
  %1421 = vmatprep.subr.mxu0 0.0
  %1422 = vmatpush1.msra.mxu0 %v60
  %1423 = vmatprep.subr.mxu0 0.0
  %1424 = vmatpush1.msra.mxu0 0.0
  %1425 = vmatprep.subr.mxu0 0.0
  %1426 = vmatpush1.msra.mxu0 0.0
  %1427 = vmatprep.subr.mxu0 0.0
  %1428 = vmatpush1.msra.mxu0 0.0
  %1429 = vmatprep.subr.mxu0 0.0
  %1430 = vmatpush1.msra.mxu0 0.0
  %1431 = vmatprep.subr.mxu0 0.0
  %1432 = vmatpush1.msra.mxu0 0.0
  %1433 = vmatprep.subr.mxu0 0.0
  %1434 = vmatpush1.msra.mxu0 0.0
  %1435 = vmatprep.subr.mxu0 0.0
  %1436 = vmatpush1.msra.mxu0 0.0
  %1437 = vmatprep.subr.mxu0 0.0
  %1438 = vmatpush1.msra.mxu0 0.0
  %1439 = vmatprep.subr.mxu0 0.0
  %1440 = vmatpush1.msra.mxu0 0.0
  %1441 = vmatprep.subr.mxu0 0.0
  %1442 = vmatpush1.msra.mxu0 0.0
  %1443 = vmatprep.subr.mxu0 0.0
  %1444 = vmatpush1.msra.mxu0 0.0
  %1445 = vmatprep.subr.mxu0 0.0
  %1446 = vmatpush1.msra.mxu0 0.0
  %1447 = vmatprep.subr.mxu0 0.0
  %1448 = vmatpush1.msra.mxu0 0.0
  %1449 = vmatprep.subr.mxu0 0.0
  %1450 = vmatpush1.msra.mxu0 0.0
  %1451 = vmatprep.subr.mxu0 0.0
  %1452 = vmatpush1.msra.mxu0 0.0
  %1453 = vmatprep.subr.mxu0 0.0
  %1454 = vmatpush1.msra.mxu0 0.0
  %1455 = vmatprep.subr.mxu0 0.0
  %1456 = vmatpush1.msra.mxu0 0.0
  %1457 = vmatprep.subr.mxu0 0.0
  %1458 = vmatpush1.msra.mxu0 0.0
  %1459 = vmatprep.subr.mxu0 0.0
  %1460 = vmatpush1.msra.mxu0 0.0
  %1461 = vmatprep.subr.mxu0 0.0
  %1462 = vmatpush1.msra.mxu0 0.0
  %1463 = vmatprep.subr.mxu0 0.0
  %1464 = vmatpush1.msra.mxu0 0.0
  %1465 = vmatprep.subr.mxu0 0.0
  %1466 = vmatpush1.msra.mxu0 0.0
  %1467 = vmatprep.subr.mxu0 0.0
  %1468 = vmatpush1.msra.mxu0 0.0
  %1469 = vmatprep.subr.mxu0 0.0
  %1470 = vmatpush1.msra.mxu0 0.0
  %1471 = vmatprep.subr.mxu0 0.0
  %1472 = vmatpush1.msra.mxu0 0.0
  %1473 = vmatprep.subr.mxu0 0.0
  %1474 = vmatpush1.msra.mxu0 0.0
  %1475 = vmatprep.subr.mxu0 0.0
  %1476 = vmatpush1.msra.mxu0 0.0
  %1477 = vmatprep.subr.mxu0 0.0
  %1478 = vmatpush1.msra.mxu0 0.0
  %1479 = vmatprep.mubr.f32.mxu0 0.0
  %1480 = vmatmul.mubr.f32.gmra.mrb[0].mxu0 %v1413
  %v1481 = vpop.f32.mrb[0].mxu0
  %v1482 = vadd.f32 %v1410, %v1481
  %v1483 = vpop.f32.mrb[0].mxu0
  %1484 = vdwg.mxu0
  %v1485 = vtanh.pop %v1482
  %v1486 = vrot.slane %v1030, 6
  %v1488 = vrot.slane %v1106, 4
  %v1490 = vrot.slane %v1182, 2
  %v1492 = vrot.slane %v1333, 6
  %v1494 = vrot.slane %v1409, 4
  %v1497 = vrot.slane %v1485, 2
  %v1499 = vsel %vm788, %v953, %v1486
  %v1500 = vsel %vm89, %v1499, %v1488
  %v1501 = vsel %vm791, %v1500, %v1490
  %v1502 = vsel %vm788, %v1256, %v1492
  %v1503 = vsel %vm89, %v1502, %v1494
  %v1504 = vsel %vm791, %v1503, %v1497
  %v1506 = vlaneseq
  %v1507 = vshrl.u32 %v1506, 7
  %v1508 = vsub.s32 0, %v1507
  %v1509 = vrot.slane %v66, %v1508
  %v1512 = vsel %vm168, %v1501, 0
  %v1515 = vsel %vm168, %v1504, 0
  %1517 = vmatprep.subr.mxu0 0.0
  %1518 = vmatpush1.msra.mxu0 %v62
  %1519 = vmatprep.subr.mxu0 0.0
  %1520 = vmatpush1.msra.mxu0 %v63
  %1521 = vmatprep.subr.mxu0 0.0
  %1522 = vmatpush1.msra.mxu0 %v64
  %1523 = vmatprep.subr.mxu0 0.0
  %1524 = vmatpush1.msra.mxu0 %v65
  %1525 = vmatprep.subr.mxu0 0.0
  %1526 = vmatpush1.msra.mxu0 0.0
  %1527 = vmatprep.subr.mxu0 0.0
  %1528 = vmatpush1.msra.mxu0 0.0
  %1529 = vmatprep.subr.mxu0 0.0
  %1530 = vmatpush1.msra.mxu0 0.0
  %1531 = vmatprep.subr.mxu0 0.0
  %1532 = vmatpush1.msra.mxu0 0.0
  %1533 = vmatprep.subr.mxu0 0.0
  %1534 = vmatpush1.msra.mxu0 0.0
  %1535 = vmatprep.subr.mxu0 0.0
  %1536 = vmatpush1.msra.mxu0 0.0
  %1537 = vmatprep.subr.mxu0 0.0
  %1538 = vmatpush1.msra.mxu0 0.0
  %1539 = vmatprep.subr.mxu0 0.0
  %1540 = vmatpush1.msra.mxu0 0.0
  %1541 = vmatprep.subr.mxu0 0.0
  %1542 = vmatpush1.msra.mxu0 0.0
  %1543 = vmatprep.subr.mxu0 0.0
  %1544 = vmatpush1.msra.mxu0 0.0
  %1545 = vmatprep.subr.mxu0 0.0
  %1546 = vmatpush1.msra.mxu0 0.0
  %1547 = vmatprep.subr.mxu0 0.0
  %1548 = vmatpush1.msra.mxu0 0.0
  %1549 = vmatprep.subr.mxu0 0.0
  %1550 = vmatpush1.msra.mxu0 0.0
  %1551 = vmatprep.subr.mxu0 0.0
  %1552 = vmatpush1.msra.mxu0 0.0
  %1553 = vmatprep.subr.mxu0 0.0
  %1554 = vmatpush1.msra.mxu0 0.0
  %1555 = vmatprep.subr.mxu0 0.0
  %1556 = vmatpush1.msra.mxu0 0.0
  %1557 = vmatprep.subr.mxu0 0.0
  %1558 = vmatpush1.msra.mxu0 0.0
  %1559 = vmatprep.subr.mxu0 0.0
  %1560 = vmatpush1.msra.mxu0 0.0
  %1561 = vmatprep.subr.mxu0 0.0
  %1562 = vmatpush1.msra.mxu0 0.0
  %1563 = vmatprep.subr.mxu0 0.0
  %1564 = vmatpush1.msra.mxu0 0.0
  %1565 = vmatprep.subr.mxu0 0.0
  %1566 = vmatpush1.msra.mxu0 0.0
  %1567 = vmatprep.subr.mxu0 0.0
  %1568 = vmatpush1.msra.mxu0 0.0
  %1569 = vmatprep.subr.mxu0 0.0
  %1570 = vmatpush1.msra.mxu0 0.0
  %1571 = vmatprep.subr.mxu0 0.0
  %1572 = vmatpush1.msra.mxu0 0.0
  %1573 = vmatprep.subr.mxu0 0.0
  %1574 = vmatpush1.msra.mxu0 0.0
  %1575 = vmatprep.subr.mxu0 0.0
  %1576 = vmatpush1.msra.mxu0 0.0
  %1577 = vmatprep.subr.mxu0 0.0
  %1578 = vmatpush1.msra.mxu0 0.0
  %1579 = vmatprep.subr.mxu0 0.0
  %1580 = vmatpush1.msra.mxu0 0.0
  %1581 = vmatprep.mubr.f32.mxu0 0.0
  %1582 = vmatmul.mubr.f32.gmra.mrb[0].mxu0 %v1512
  %v1583 = vpop.f32.mrb[0].mxu0
  %v1584 = vadd.f32 %v1509, %v1583
  %v1585 = vpop.f32.mrb[0].mxu0
  %1586 = vmatprep.mubr.f32.mxu0 0.0
  %1587 = vmatmul.mubr.f32.gmra.mrb[0].mxu0 %v1515
  %v1588 = vpop.f32.mrb[0].mxu0
  %v1589 = vadd.f32 %v1509, %v1588
  %v1590 = vpop.f32.mrb[0].mxu0
  %1591 = vdwg.mxu0
  %v1592 = vld [vmem:[%s1] sm:$0xff]
  %v1593 = vld [vmem:[%s1 + $0x8] sm:$0xff]
  %v1595 = vlaneseq
  %v1596 = vshrl.u32 %v1595, 7
  %v1597 = vsub.s32 0, %v1596
  %v1598 = vrot.slane %v68, %v1597
  %vm1600 = vcmask 23552
  %v1602 = vsel %vm1600, %v1592, 0
  %v1605 = vsel %vm1600, %v1593, 0
  %vm1607 = vcmask 1042432
  %v1609 = vsel %vm1607, %v67, 0
  %1611 = vmatprep.subr.mxu0 0.0
  %1612 = vmatpush1.msra.mxu0 %v1609
  %1613 = vmatprep.subr.mxu0 0.0
  %1614 = vmatpush1.msra.mxu0 0.0
  %1615 = vmatprep.subr.mxu0 0.0
  %1616 = vmatpush1.msra.mxu0 0.0
  %1617 = vmatprep.subr.mxu0 0.0
  %1618 = vmatpush1.msra.mxu0 0.0
  %1619 = vmatprep.subr.mxu0 0.0
  %1620 = vmatpush1.msra.mxu0 0.0
  %1621 = vmatprep.subr.mxu0 0.0
  %1622 = vmatpush1.msra.mxu0 0.0
  %1623 = vmatprep.subr.mxu0 0.0
  %1624 = vmatpush1.msra.mxu0 0.0
  %1625 = vmatprep.subr.mxu0 0.0
  %1626 = vmatpush1.msra.mxu0 0.0
  %1627 = vmatprep.subr.mxu0 0.0
  %1628 = vmatpush1.msra.mxu0 0.0
  %1629 = vmatprep.subr.mxu0 0.0
  %1630 = vmatpush1.msra.mxu0 0.0
  %1631 = vmatprep.subr.mxu0 0.0
  %1632 = vmatpush1.msra.mxu0 0.0
  %1633 = vmatprep.subr.mxu0 0.0
  %1634 = vmatpush1.msra.mxu0 0.0
  %1635 = vmatprep.subr.mxu0 0.0
  %1636 = vmatpush1.msra.mxu0 0.0
  %1637 = vmatprep.subr.mxu0 0.0
  %1638 = vmatpush1.msra.mxu0 0.0
  %1639 = vmatprep.subr.mxu0 0.0
  %1640 = vmatpush1.msra.mxu0 0.0
  %1641 = vmatprep.subr.mxu0 0.0
  %1642 = vmatpush1.msra.mxu0 0.0
  %1643 = vmatprep.subr.mxu0 0.0
  %1644 = vmatpush1.msra.mxu0 0.0
  %1645 = vmatprep.subr.mxu0 0.0
  %1646 = vmatpush1.msra.mxu0 0.0
  %1647 = vmatprep.subr.mxu0 0.0
  %1648 = vmatpush1.msra.mxu0 0.0
  %1649 = vmatprep.subr.mxu0 0.0
  %1650 = vmatpush1.msra.mxu0 0.0
  %1651 = vmatprep.subr.mxu0 0.0
  %1652 = vmatpush1.msra.mxu0 0.0
  %1653 = vmatprep.subr.mxu0 0.0
  %1654 = vmatpush1.msra.mxu0 0.0
  %1655 = vmatprep.subr.mxu0 0.0
  %1656 = vmatpush1.msra.mxu0 0.0
  %1657 = vmatprep.subr.mxu0 0.0
  %1658 = vmatpush1.msra.mxu0 0.0
  %1659 = vmatprep.subr.mxu0 0.0
  %1660 = vmatpush1.msra.mxu0 0.0
  %1661 = vmatprep.subr.mxu0 0.0
  %1662 = vmatpush1.msra.mxu0 0.0
  %1663 = vmatprep.subr.mxu0 0.0
  %1664 = vmatpush1.msra.mxu0 0.0
  %1665 = vmatprep.subr.mxu0 0.0
  %1666 = vmatpush1.msra.mxu0 0.0
  %1667 = vmatprep.subr.mxu0 0.0
  %1668 = vmatpush1.msra.mxu0 0.0
  %1669 = vmatprep.subr.mxu0 0.0
  %1670 = vmatpush1.msra.mxu0 0.0
  %1671 = vmatprep.subr.mxu0 0.0
  %1672 = vmatpush1.msra.mxu0 0.0
  %1673 = vmatprep.subr.mxu0 0.0
  %1674 = vmatpush1.msra.mxu0 0.0
  %1675 = vmatprep.mubr.f32.mxu0 0.0
  %1676 = vmatmul.mubr.f32.gmra.mrb[0].mxu0 %v1602
  %v1677 = vpop.f32.mrb[0].mxu0
  %v1678 = vadd.f32 %v1598, %v1677
  %v1679 = vpop.f32.mrb[0].mxu0
  %1680 = vmatprep.mubr.f32.mxu0 0.0
  %1681 = vmatmul.mubr.f32.gmra.mrb[0].mxu0 %v1605
  %v1682 = vpop.f32.mrb[0].mxu0
  %v1683 = vadd.f32 %v1598, %v1682
  %v1684 = vpop.f32.mrb[0].mxu0
  %1685 = vdwg.mxu0
  %v1686 = vtanh.pop %v1678
  %v1687 = vtanh.pop %v1683
  %v1689 = vlaneseq
  %v1690 = vshrl.u32 %v1689, 7
  %v1691 = vsub.s32 0, %v1690
  %v1692 = vrot.slane %v73, %v1691
  %v1695 = vsel %vm168, %v1686, 0
  %v1698 = vsel %vm168, %v1687, 0
  %1700 = vmatprep.subr.mxu0 0.0
  %1701 = vmatpush1.msra.mxu0 %v69
  %1702 = vmatprep.subr.mxu0 0.0
  %1703 = vmatpush1.msra.mxu0 %v70
  %1704 = vmatprep.subr.mxu0 0.0
  %1705 = vmatpush1.msra.mxu0 %v71
  %1706 = vmatprep.subr.mxu0 0.0
  %1707 = vmatpush1.msra.mxu0 %v72
  %1708 = vmatprep.subr.mxu0 0.0
  %1709 = vmatpush1.msra.mxu0 0.0
  %1710 = vmatprep.subr.mxu0 0.0
  %1711 = vmatpush1.msra.mxu0 0.0
  %1712 = vmatprep.subr.mxu0 0.0
  %1713 = vmatpush1.msra.mxu0 0.0
  %1714 = vmatprep.subr.mxu0 0.0
  %1715 = vmatpush1.msra.mxu0 0.0
  %1716 = vmatprep.subr.mxu0 0.0
  %1717 = vmatpush1.msra.mxu0 0.0
  %1718 = vmatprep.subr.mxu0 0.0
  %1719 = vmatpush1.msra.mxu0 0.0
  %1720 = vmatprep.subr.mxu0 0.0
  %1721 = vmatpush1.msra.mxu0 0.0
  %1722 = vmatprep.subr.mxu0 0.0
  %1723 = vmatpush1.msra.mxu0 0.0
  %1724 = vmatprep.subr.mxu0 0.0
  %1725 = vmatpush1.msra.mxu0 0.0
  %1726 = vmatprep.subr.mxu0 0.0
  %1727 = vmatpush1.msra.mxu0 0.0
  %1728 = vmatprep.subr.mxu0 0.0
  %1729 = vmatpush1.msra.mxu0 0.0
  %1730 = vmatprep.subr.mxu0 0.0
  %1731 = vmatpush1.msra.mxu0 0.0
  %1732 = vmatprep.subr.mxu0 0.0
  %1733 = vmatpush1.msra.mxu0 0.0
  %1734 = vmatprep.subr.mxu0 0.0
  %1735 = vmatpush1.msra.mxu0 0.0
  %1736 = vmatprep.subr.mxu0 0.0
  %1737 = vmatpush1.msra.mxu0 0.0
  %1738 = vmatprep.subr.mxu0 0.0
  %1739 = vmatpush1.msra.mxu0 0.0
  %1740 = vmatprep.subr.mxu0 0.0
  %1741 = vmatpush1.msra.mxu0 0.0
  %1742 = vmatprep.subr.mxu0 0.0
  %1743 = vmatpush1.msra.mxu0 0.0
  %1744 = vmatprep.subr.mxu0 0.0
  %1745 = vmatpush1.msra.mxu0 0.0
  %1746 = vmatprep.subr.mxu0 0.0
  %1747 = vmatpush1.msra.mxu0 0.0
  %1748 = vmatprep.subr.mxu0 0.0
  %1749 = vmatpush1.msra.mxu0 0.0
  %1750 = vmatprep.subr.mxu0 0.0
  %1751 = vmatpush1.msra.mxu0 0.0
  %1752 = vmatprep.subr.mxu0 0.0
  %1753 = vmatpush1.msra.mxu0 0.0
  %1754 = vmatprep.subr.mxu0 0.0
  %1755 = vmatpush1.msra.mxu0 0.0
  %1756 = vmatprep.subr.mxu0 0.0
  %1757 = vmatpush1.msra.mxu0 0.0
  %1758 = vmatprep.subr.mxu0 0.0
  %1759 = vmatpush1.msra.mxu0 0.0
  %1760 = vmatprep.subr.mxu0 0.0
  %1761 = vmatpush1.msra.mxu0 0.0
  %1762 = vmatprep.subr.mxu0 0.0
  %1763 = vmatpush1.msra.mxu0 0.0
  %1764 = vmatprep.mubr.f32.mxu0 0.0
  %1765 = vmatmul.mubr.f32.gmra.mrb[0].mxu0 %v1695
  %v1766 = vpop.f32.mrb[0].mxu0
  %v1767 = vadd.f32 %v1692, %v1766
  %v1768 = vpop.f32.mrb[0].mxu0
  %1769 = vmatprep.mubr.f32.mxu0 0.0
  %1770 = vmatmul.mubr.f32.gmra.mrb[0].mxu0 %v1698
  %v1771 = vpop.f32.mrb[0].mxu0
  %v1772 = vadd.f32 %v1692, %v1771
  %v1773 = vpop.f32.mrb[0].mxu0
  %1774 = vdwg.mxu0
  %v1775 = vtanh.pop %v1767
  %v1776 = vtanh.pop %v1772
  %v1777 = vmul.f32 %v1584, %v1775
  %v1778 = vmul.f32 %v1589, %v1776
  %vm1779 = vcmask 130048
  %v1780 = vsel %vm1779, %v1777, 0.0
  %1781 = vadd.xlane.f32.xlu0 %v1780
  %v1782 = vpop.xlane.xlu0 %1781
  %v1783 = vsel %vm1779, %v1778, 0.0
  %1784 = vadd.xlane.f32.xlu0 %v1783
  %v1785 = vpop.xlane.xlu0 %1784
  %vm1786 = vcmask 7168
  %1787 = vst.msk [vmem:[%s14] sm:$0xff] %vm1786, %v1782
  %1788 = vst.msk [vmem:[%s14 + $0x8] sm:$0xff] %vm1786, %v1785
  // Predicated region
  $region58: #{deeponet_rnn_forward.1} parent=0 // pred_check
    _
  $region59: #{deeponet_rnn_forward.1} parent=0 // pred_check_branch
    %1790 = sbr.rel (0) target = $region61
  $region60: #{deeponet_rnn_forward.1} parent=0 // pred_region
    _
  $region61: #{deeponet_rnn_forward.1} parent=0 // pred_fallthru
    _
  // Predicated region
  $region62: #{deeponet_rnn_forward.1} parent=0 // pred_check
    _
  $region63: #{deeponet_rnn_forward.1} parent=0 // pred_check_branch
    %1792 = sbr.rel (0) target = $region65
  $region64: #{deeponet_rnn_forward.1} parent=0 // pred_region
    _
  $region65: #{deeponet_rnn_forward.1} parent=0 // pred_fallthru
    _

</llo_original>
